<compile_context>
chip_gen: v5e
topology: v5e:2x2
jax: 0.10.0
libtpu: 0.0.40
codegen_flags: <defaults>
</compile_context>

<pallas_src>
import functools

import jax
import jax.numpy as jnp
from jax.experimental import pallas as pl
from jax.experimental.pallas import tpu as pltpu

LANE = 128
H1_DIM = 1024
H2_DIM = 512


def _round_up(x, m):
    return ((x + m - 1) // m) * m


# ---------------------------------------------------------------------------
# Kernel: fused 3-layer MLP, fc1-K blocked along the inner grid axis.
# Grid = (batch_tiles [parallel], k_tiles [arbitrary]).
# ---------------------------------------------------------------------------
def _mlp_head_kernel(x_ref, w1_ref, b1_ref, w2_ref, b2_ref, w3_ref, b3_ref,
                     out_ref, h1_acc_ref):
    k = pl.program_id(1)

    @pl.when(k == 0)
    def _():
        h1_acc_ref[...] = jnp.zeros_like(h1_acc_ref)

    # fc1 partial product for this K slab (bf16 operands, f32 accumulation).
    h1_acc_ref[...] += jnp.dot(x_ref[...], w1_ref[...],
                               preferred_element_type=jnp.float32)

    @pl.when(k == pl.num_programs(1) - 1)
    def _():
        h1 = jnp.maximum(h1_acc_ref[...] + b1_ref[...], 0.0).astype(jnp.bfloat16)
        h2 = jnp.dot(h1, w2_ref[...], preferred_element_type=jnp.float32)
        h2 = jnp.maximum(h2 + b2_ref[...], 0.0).astype(jnp.bfloat16)
        out = jnp.dot(h2, w3_ref[...], preferred_element_type=jnp.float32)
        out_ref[...] = (out + b3_ref[...]).astype(out_ref.dtype)


# ---------------------------------------------------------------------------
# Tiling / VMEM policy
# ---------------------------------------------------------------------------
def _pick_tile_m(n):
    if n >= 512:
        return 256              # amortize grid-step overhead; 256-wide MXU (v6e/v7x)
    if n > 128:
        return 128
    # Small batch: use a small 16-aligned tile (splits into two tiles when it
    # can) so padded rows aren't computed and both v7x TCs can get work.
    half = _round_up(max(-(-n // 2), 8), 16)
    return min(128, max(16, half))


def _pick_tile_k(k_pad):
    if k_pad <= 1024:
        return k_pad
    for tk in (1024, 512, 256, 128):
        if k_pad % tk == 0:
            return tk
    return 128                  # unreachable: k_pad is a multiple of 128


def _vmem_limit_bytes(tile_m, tile_k, out_pad):
    bf16, f32 = 2, 4
    # Double-buffered pipeline blocks.
    budget = 2 * (tile_m * tile_k * bf16              # x tile
                  + tile_k * H1_DIM * bf16            # W1 tile
                  + H1_DIM * H2_DIM * bf16            # W2 (constant block)
                  + H2_DIM * out_pad * bf16           # W3 (constant block)
                  + (H1_DIM + H2_DIM + out_pad) * f32  # biases
                  + tile_m * out_pad * f32)           # output tile
    # Scratch accumulator + live intermediates.
    budget += tile_m * H1_DIM * f32
    budget += tile_m * (H1_DIM * bf16 + H2_DIM * (f32 + bf16))
    want = max(32 << 20, int(1.25 * budget) + (8 << 20))
    try:
        phys = int(pltpu.get_tpu_info().vmem_capacity_bytes)
    except Exception:            # hardware-info query only; not a compile path
        phys = 64 << 20          # conservative (v7x per-core VMEM)
    return min(want, phys - (8 << 20))


# ---------------------------------------------------------------------------
# Parameter preparation (run ONCE at load time, not per forward call).
# ---------------------------------------------------------------------------
def prepare_params(params):
    """Pad to lane-aligned shapes and cast matmul operands to bf16, once."""
    w1, b1 = params["w1"], params["b1"]
    w2, b2 = params["w2"], params["b2"]
    w3, b3 = params["w3"], params["b3"]
    in_dim = w1.shape[0]
    out_dim = w3.shape[1]
    assert w1.shape[1] == H1_DIM and w2.shape == (H1_DIM, H2_DIM)
    assert w3.shape[0] == H2_DIM

    k_pad = _round_up(in_dim, LANE)
    out_pad = _round_up(out_dim, LANE)
    return {
        "w1": jnp.pad(w1, ((0, k_pad - in_dim), (0, 0))).astype(jnp.bfloat16),
        "b1": b1.reshape(1, H1_DIM).astype(jnp.float32),
        "w2": w2.astype(jnp.bfloat16),
        "b2": b2.reshape(1, H2_DIM).astype(jnp.float32),
        "w3": jnp.pad(w3, ((0, 0), (0, out_pad - out_dim))).astype(jnp.bfloat16),
        "b3": jnp.pad(b3.reshape(1, out_dim),
                      ((0, 0), (0, out_pad - out_dim))).astype(jnp.float32),
    }


# ---------------------------------------------------------------------------
# Forward pass
# ---------------------------------------------------------------------------
def contour_sample_refine_head(x_nchw, prepared, out_dim):
    """Forward pass of ContourSampleRefineHead.

    x_nchw:   (N, C, H, W); C*H*W must match the in_channels the params were
              prepared for.
    prepared: dict from prepare_params() (already padded + bf16-cast).
    out_dim:  4*order + 2 (static).
    """
    n = x_nchw.shape[0]
    w1, b1 = prepared["w1"], prepared["b1"]
    w2, b2 = prepared["w2"], prepared["b2"]
    w3, b3 = prepared["w3"], prepared["b3"]
    k_pad, out_pad = w1.shape[0], w3.shape[1]

    x = x_nchw.reshape(n, -1)                       # torch.flatten(x, 1)
    in_dim = x.shape[1]
    assert in_dim <= k_pad and k_pad - in_dim < LANE, \
        "params were prepared for a different in_channels"

    tile_m = _pick_tile_m(n)
    tile_k = _pick_tile_k(k_pad)
    n_pad = _round_up(max(n, 1), tile_m)

    # Cast to bf16 first, then (only if needed) a single bf16 pad.
    x = x.astype(jnp.bfloat16)
    if n_pad != n or k_pad != in_dim:
        x = jnp.pad(x, ((0, n_pad - n), (0, k_pad - in_dim)))

    grid = (n_pad // tile_m, k_pad // tile_k)

    flops = 2 * n_pad * (k_pad * H1_DIM + H1_DIM * H2_DIM + H2_DIM * out_pad)
    bytes_accessed = (x.size * 2 + w1.size * 2 + w2.size * 2 + w3.size * 2
                      + (b1.size + b2.size + b3.size) * 4
                      + n_pad * out_pad * 4)
    cost = pl.CostEstimate(flops=int(flops), transcendentals=0,
                           bytes_accessed=int(bytes_accessed))

    grid_spec = pltpu.PrefetchScalarGridSpec(
        num_scalar_prefetch=0,
        grid=grid,
        in_specs=[
            pl.BlockSpec((tile_m, tile_k), lambda i, k: (i, k)),      # x
            pl.BlockSpec((tile_k, H1_DIM), lambda i, k: (k, 0)),      # W1
            pl.BlockSpec((1, H1_DIM), lambda i, k: (0, 0)),           # b1
            pl.BlockSpec((H1_DIM, H2_DIM), lambda i, k: (0, 0)),      # W2
            pl.BlockSpec((1, H2_DIM), lambda i, k: (0, 0)),           # b2
            pl.BlockSpec((H2_DIM, out_pad), lambda i, k: (0, 0)),     # W3
            pl.BlockSpec((1, out_pad), lambda i, k: (0, 0)),          # b3
        ],
        out_specs=pl.BlockSpec((tile_m, out_pad), lambda i, k: (i, 0)),
        scratch_shapes=[pltpu.VMEM((tile_m, H1_DIM), jnp.float32)],
    )

    out_full = pl.pallas_call(
        _mlp_head_kernel,
        out_shape=jax.ShapeDtypeStruct((n_pad, out_pad), jnp.float32),
        grid_spec=grid_spec,
        compiler_params=pltpu.CompilerParams(
            dimension_semantics=("parallel", "arbitrary"),
            vmem_limit_bytes=_vmem_limit_bytes(tile_m, tile_k, out_pad)),
        cost_estimate=cost,
    )(x, w1, b1, w2, b2, w3, b3)

    return out_full[:n, :out_dim]


# ---------------------------------------------------------------------------
# Init + references (for the self-test)
# ---------------------------------------------------------------------------
def init_params(key, in_channels, order):
    """Mimics nn.Linear default init (uniform +-1/sqrt(fan_in)); weights are
    stored as (in, out) == W^T of PyTorch's (out, in)."""
    def linear(k, fan_in, fan_out):
        kw, kb = jax.random.split(k)
        bound = 1.0 / jnp.sqrt(jnp.float32(fan_in))
        w = jax.random.uniform(kw, (fan_in, fan_out), jnp.float32, -bound, bound)
        b = jax.random.uniform(kb, (1, fan_out), jnp.float32, -bound, bound)
        return w, b

    k1, k2, k3 = jax.random.split(key, 3)
    out_dim = 4 * order + 2
    w1, b1 = linear(k1, in_channels, H1_DIM)
    w2, b2 = linear(k2, H1_DIM, H2_DIM)
    w3, b3 = linear(k3, H2_DIM, out_dim)
    return {"w1": w1, "b1": b1, "w2": w2, "b2": b2, "w3": w3, "b3": b3}


def _reference_f32(x_nchw, p):
    """PyTorch-equivalent all-f32 reference."""
    x = x_nchw.reshape(x_nchw.shape[0], -1)
    h1 = jnp.maximum(x @ p["w1"] + p["b1"], 0.0)
    h2 = jnp.maximum(h1 @ p["w2"] + p["b2"], 0.0)
    return h2 @ p["w3"] + p["b3"]


def _reference_bf16_mxu(x_nchw, p):
    """Reference with the kernel's bf16-operand / f32-accumulate numerics."""
    x = x_nchw.reshape(x_nchw.shape[0], -1).astype(jnp.bfloat16)
    w1 = p["w1"].astype(jnp.bfloat16)
    w2 = p["w2"].astype(jnp.bfloat16)
    w3 = p["w3"].astype(jnp.bfloat16)
    h1 = jnp.maximum(jnp.dot(x, w1, preferred_element_type=jnp.float32)
                     + p["b1"], 0.0).astype(jnp.bfloat16)
    h2 = jnp.maximum(jnp.dot(h1, w2, preferred_element_type=jnp.float32)
                     + p["b2"], 0.0).astype(jnp.bfloat16)
    return jnp.dot(h2, w3, preferred_element_type=jnp.float32) + p["b3"]


if __name__ == "__main__":
    key = jax.random.PRNGKey(0)
    k_x, k_p = jax.random.split(key)

    # Small but shape-consistent example: N=16, C=4, H=W=8 -> in_channels=256
    N, C, H, W = 16, 4, 8, 8
    in_channels = C * H * W
    order = 2                                   # fc3 output = 4*order + 2 = 10
    out_dim = 4 * order + 2

    x = jax.random.normal(k_x, (N, C, H, W), jnp.float32)
    raw_params = init_params(k_p, in_channels, order)

    # Weight padding/casting happens exactly once, at load time.
    prepared = prepare_params(raw_params)

    fwd = jax.jit(contour_sample_refine_head, static_argnames=("out_dim",))
    out = fwd(x, prepared, out_dim=out_dim)
    out = jax.block_until_ready(out)
    assert out.shape == (N, out_dim)

    # Tight check against a reference with the same bf16-operand numerics.
    ref_bf16 = _reference_bf16_mxu(x, raw_params)
    assert jnp.allclose(out, ref_bf16, atol=2e-2, rtol=2e-2), \
        float(jnp.max(jnp.abs(out - ref_bf16)))

    # Loose sanity check vs. the all-f32 PyTorch-equivalent reference
    # (kernel intentionally uses bf16 MXU operands with f32 accumulation).
    ref_f32 = _reference_f32(x, raw_params)
    assert jnp.allclose(out, ref_f32, atol=1e-1, rtol=1e-1), \
        float(jnp.max(jnp.abs(out - ref_f32)))

    print("KERNEL_OK")
</pallas_src>

<mosaic_0001>
module attributes {stable_mosaic.version = 11 : i64} {
  func.func @_mlp_head_kernel(%arg0: i32, %arg1: i32, %arg2: memref<16x256xbf16, #tpu.memory_space<vmem>>, %arg3: memref<256x1024xbf16, #tpu.memory_space<vmem>>, %arg4: memref<1x1024xf32, #tpu.memory_space<vmem>>, %arg5: memref<1024x512xbf16, #tpu.memory_space<vmem>>, %arg6: memref<1x512xf32, #tpu.memory_space<vmem>>, %arg7: memref<512x128xbf16, #tpu.memory_space<vmem>>, %arg8: memref<1x128xf32, #tpu.memory_space<vmem>>, %arg9: memref<16x128xf32, #tpu.memory_space<vmem>>, %arg10: memref<16x1024xf32, #tpu.memory_space<vmem>>) attributes {dimension_semantics = [#tpu.dimension_semantics<parallel>, #tpu.dimension_semantics<arbitrary>], iteration_bounds = array<i64: 1, 1>, scalar_prefetch = 0 : i64, scratch_operands = 1 : i64, tpu.core_type = #tpu.core_type<tc>, window_params = [{transform_indices = @transform_0, window_bounds = array<i64: 16, 256>}, {transform_indices = @transform_1, window_bounds = array<i64: 256, 1024>}, {pipeline_mode = #tpu.pipeline_mode<synchronous>, transform_indices = @transform_2, window_bounds = array<i64: 1, 1024>}, {pipeline_mode = #tpu.pipeline_mode<synchronous>, transform_indices = @transform_3, window_bounds = array<i64: 1024, 512>}, {pipeline_mode = #tpu.pipeline_mode<synchronous>, transform_indices = @transform_4, window_bounds = array<i64: 1, 512>}, {pipeline_mode = #tpu.pipeline_mode<synchronous>, transform_indices = @transform_5, window_bounds = array<i64: 512, 128>}, {pipeline_mode = #tpu.pipeline_mode<synchronous>, transform_indices = @transform_6, window_bounds = array<i64: 1, 128>}, {transform_indices = @transform_7, window_bounds = array<i64: 16, 128>}]} {
    %c0_i32 = arith.constant 0 : i32
    %0 = arith.cmpi eq, %arg1, %c0_i32 : i32
    %1 = arith.extui %0 : i1 to i32
    %c0_i32_0 = arith.constant 0 : i32
    %2 = arith.cmpi ne, %1, %c0_i32_0 : i32
    scf.if %2 {
      %cst_10 = arith.constant 0.000000e+00 : f32
      %12 = vector.broadcast %cst_10 : f32 to vector<16x1024xf32>
      %c0_11 = arith.constant 0 : index
      %c0_12 = arith.constant 0 : index
      %13 = vector.load %arg10[%c0_11, %c0_12] : memref<16x1024xf32, #tpu.memory_space<vmem>>, vector<16x1024xf32>
      tpu.vector_store %arg10[%c0_11, %c0_12], %12 {strides = array<i32>} : memref<16x1024xf32, #tpu.memory_space<vmem>>, vector<16x1024xf32>,
    } else {
    }
    %c0 = arith.constant 0 : index
    %c0_1 = arith.constant 0 : index
    %3 = vector.load %arg10[%c0, %c0_1] : memref<16x1024xf32, #tpu.memory_space<vmem>>, vector<16x1024xf32>
    %c0_2 = arith.constant 0 : index
    %c0_3 = arith.constant 0 : index
    %4 = vector.load %arg2[%c0_2, %c0_3] : memref<16x256xbf16, #tpu.memory_space<vmem>>, vector<16x256xbf16>
    %c0_4 = arith.constant 0 : index
    %c0_5 = arith.constant 0 : index
    %5 = vector.load %arg3[%c0_4, %c0_5] : memref<256x1024xbf16, #tpu.memory_space<vmem>>, vector<256x1024xbf16>
    %cst = arith.constant dense<0.000000e+00> : vector<16x1024xf32>
    %6 = tpu.matmul %4, %5, %cst {dimension_numbers = #tpu.dot_dimension_numbers<[1], [0], [0], [1], [0, 0, 1, 1], [], []>} : vector<16x256xbf16>, vector<256x1024xbf16>, vector<16x1024xf32> -> vector<16x1024xf32>
    %7 = arith.addf %3, %6 : vector<16x1024xf32>
    %c0_6 = arith.constant 0 : index
    %c0_7 = arith.constant 0 : index
    %8 = vector.load %arg10[%c0_6, %c0_7] : memref<16x1024xf32, #tpu.memory_space<vmem>>, vector<16x1024xf32>
    tpu.vector_store %arg10[%c0_6, %c0_7], %7 {strides = array<i32>} : memref<16x1024xf32, #tpu.memory_space<vmem>>, vector<16x1024xf32>,
    %c0_i32_8 = arith.constant 0 : i32
    %9 = arith.cmpi eq, %arg1, %c0_i32_8 : i32
    %10 = arith.extui %9 : i1 to i32
    %c0_i32_9 = arith.constant 0 : i32
    %11 = arith.cmpi ne, %10, %c0_i32_9 : i32
    scf.if %11 {
      %c0_10 = arith.constant 0 : index
      %c0_11 = arith.constant 0 : index
      %12 = vector.load %arg10[%c0_10, %c0_11] : memref<16x1024xf32, #tpu.memory_space<vmem>>, vector<16x1024xf32>
      %c0_12 = arith.constant 0 : index
      %c0_13 = arith.constant 0 : index
      %13 = vector.load %arg4[%c0_12, %c0_13] : memref<1x1024xf32, #tpu.memory_space<vmem>>, vector<1x1024xf32>
      %14 = vector.broadcast %13 : vector<1x1024xf32> to vector<16x1024xf32>
      %15 = arith.addf %12, %14 : vector<16x1024xf32>
      %cst_14 = arith.constant 0.000000e+00 : f32
      %16 = vector.broadcast %cst_14 : f32 to vector<16x1024xf32>
      %17 = arith.maximumf %15, %16 : vector<16x1024xf32>
      %18 = arith.truncf %17 : vector<16x1024xf32> to vector<16x1024xbf16>
      %c0_15 = arith.constant 0 : index
      %c0_16 = arith.constant 0 : index
      %19 = vector.load %arg5[%c0_15, %c0_16] : memref<1024x512xbf16, #tpu.memory_space<vmem>>, vector<1024x512xbf16>
      %cst_17 = arith.constant dense<0.000000e+00> : vector<16x512xf32>
      %20 = tpu.matmul %18, %19, %cst_17 {dimension_numbers = #tpu.dot_dimension_numbers<[1], [0], [0], [1], [0, 0, 1, 1], [], []>} : vector<16x1024xbf16>, vector<1024x512xbf16>, vector<16x512xf32> -> vector<16x512xf32>
      %c0_18 = arith.constant 0 : index
      %c0_19 = arith.constant 0 : index
      %21 = vector.load %arg6[%c0_18, %c0_19] : memref<1x512xf32, #tpu.memory_space<vmem>>, vector<1x512xf32>
      %22 = vector.broadcast %21 : vector<1x512xf32> to vector<16x512xf32>
      %23 = arith.addf %20, %22 : vector<16x512xf32>
      %cst_20 = arith.constant 0.000000e+00 : f32
      %24 = vector.broadcast %cst_20 : f32 to vector<16x512xf32>
      %25 = arith.maximumf %23, %24 : vector<16x512xf32>
      %26 = arith.truncf %25 : vector<16x512xf32> to vector<16x512xbf16>
      %c0_21 = arith.constant 0 : index
      %c0_22 = arith.constant 0 : index
      %27 = vector.load %arg7[%c0_21, %c0_22] : memref<512x128xbf16, #tpu.memory_space<vmem>>, vector<512x128xbf16>
      %cst_23 = arith.constant dense<0.000000e+00> : vector<16x128xf32>
      %28 = tpu.matmul %26, %27, %cst_23 {dimension_numbers = #tpu.dot_dimension_numbers<[1], [0], [0], [1], [0, 0, 1, 1], [], []>} : vector<16x512xbf16>, vector<512x128xbf16>, vector<16x128xf32> -> vector<16x128xf32>
      %c0_24 = arith.constant 0 : index
      %c0_25 = arith.constant 0 : index
      %29 = vector.load %arg8[%c0_24, %c0_25] : memref<1x128xf32, #tpu.memory_space<vmem>>, vector<1x128xf32>
      %30 = vector.broadcast %29 : vector<1x128xf32> to vector<16x128xf32>
      %31 = arith.addf %28, %30 : vector<16x128xf32>
      %c0_26 = arith.constant 0 : index
      %c0_27 = arith.constant 0 : index
      %32 = vector.load %arg9[%c0_26, %c0_27] : memref<16x128xf32, #tpu.memory_space<vmem>>, vector<16x128xf32>
      tpu.vector_store %arg9[%c0_26, %c0_27], %31 {strides = array<i32>} : memref<16x128xf32, #tpu.memory_space<vmem>>, vector<16x128xf32>,
    } else {
    }
    return
  }
  func.func @transform_0(%arg0: i32, %arg1: i32) -> (i32, i32) {
    %c0_i32 = arith.constant 0 : i32
    return %arg0, %arg1 : i32, i32
  }
  func.func @transform_1(%arg0: i32, %arg1: i32) -> (i32, i32) {
    %c0_i32 = arith.constant 0 : i32
    %c0_i32_0 = arith.constant 0 : i32
    return %arg1, %c0_i32 : i32, i32
  }
  func.func @transform_2(%arg0: i32, %arg1: i32) -> (i32, i32) {
    %c0_i32 = arith.constant 0 : i32
    %c0_i32_0 = arith.constant 0 : i32
    %c0_i32_1 = arith.constant 0 : i32
    return %c0_i32, %c0_i32_0 : i32, i32
  }
  func.func @transform_3(%arg0: i32, %arg1: i32) -> (i32, i32) {
    %c0_i32 = arith.constant 0 : i32
    %c0_i32_0 = arith.constant 0 : i32
    %c0_i32_1 = arith.constant 0 : i32
    return %c0_i32, %c0_i32_0 : i32, i32
  }
  func.func @transform_4(%arg0: i32, %arg1: i32) -> (i32, i32) {
    %c0_i32 = arith.constant 0 : i32
    %c0_i32_0 = arith.constant 0 : i32
    %c0_i32_1 = arith.constant 0 : i32
    return %c0_i32, %c0_i32_0 : i32, i32
  }
  func.func @transform_5(%arg0: i32, %arg1: i32) -> (i32, i32) {
    %c0_i32 = arith.constant 0 : i32
    %c0_i32_0 = arith.constant 0 : i32
    %c0_i32_1 = arith.constant 0 : i32
    return %c0_i32, %c0_i32_0 : i32, i32
  }
  func.func @transform_6(%arg0: i32, %arg1: i32) -> (i32, i32) {
    %c0_i32 = arith.constant 0 : i32
    %c0_i32_0 = arith.constant 0 : i32
    %c0_i32_1 = arith.constant 0 : i32
    return %c0_i32, %c0_i32_0 : i32, i32
  }
  func.func @transform_7(%arg0: i32, %arg1: i32) -> (i32, i32) {
    %c0_i32 = arith.constant 0 : i32
    %c0_i32_0 = arith.constant 0 : i32
    return %arg0, %c0_i32 : i32, i32
  }
}

</mosaic_0001>

<llo_original>
// kernel: contour_sample_refine_head.1
$region0: #{contour_sample_refine_head.1}
  #allocation0 [shape = 'u32[]', space=smem, size = 0x4, offset = 0x4, fixed_abs, tag = 'smem constant byte address 0x4 - core index']
  #allocation1 [shape = 'u32[72,128]{1,0:T(1,128)}', space=vmem, size = 0x9000, scoped, tag = 'internal scratch']
  #allocation2 [shape = 'f32[16,1024]{1,0:T(8,128)}', space=vmem, size = 0x10000, scoped, tag = 'scratch operand']
  %s0 = inlined_call_operand.vmem [shape: bf16[16,256], index: 0, kind: input, shape index: {}]
  %s1 = inlined_call_operand.hbm [shape: bf16[256,1024], index: 1, kind: input, shape index: {}]
  %s2 = inlined_call_operand.vmem [shape: f32[1,1024], index: 2, kind: input, shape index: {}]
  %s3 = inlined_call_operand.hbm [shape: bf16[1024,512], index: 3, kind: input, shape index: {}]
  %s4 = inlined_call_operand.vmem [shape: f32[1,512], index: 4, kind: input, shape index: {}]
  %s5 = inlined_call_operand.vmem [shape: bf16[512,128], index: 5, kind: input, shape index: {}]
  %s6 = inlined_call_operand.vmem [shape: f32[1,128], index: 6, kind: input, shape index: {}]
  %s7 = inlined_call_operand.hbm [shape: f32[16,128], index: 7, kind: output, shape index: {}]
  %s8 = sld [smem:[#allocation0]]
  $region54: #{contour_sample_refine_head.1} parent=0
    _
  %s10 = ssub.s32 1, %s8
  %s11 = scalar_select 0, %s10, %s8
  $region1: #{contour_sample_refine_head.1} parent=0
    #allocation3 [shape = 'u8[524288]{0}', space=vmem, size = 0x80000, scoped, tag = 'input window, operand 1, single buffered']
    #allocation4 [shape = 's32[1]{0}', space=sflag, size = 0x4, scoped, tag = 'scoped memory for contour_sample_refine_head.1']
    #allocation5 [shape = 's32[1]{0}', space=sflag, size = 0x4, scoped, tag = 'scoped memory for contour_sample_refine_head.1']
    #allocation6 [shape = 'u8[1048576]{0}', space=vmem, size = 0x100000, scoped, tag = 'input window, operand 3, single buffered']
    #allocation7 [shape = 's32[1]{0}', space=sflag, size = 0x4, scoped, tag = 'scoped memory for contour_sample_refine_head.1']
    #allocation8 [shape = 'u8[8192]{0}', space=vmem, size = 0x2000, scoped, tag = 'output window, operand 0, single buffered']
    %12 = vsyncpa [#allocation4], 0
    %13 = vsyncpa [#allocation7], 0
    %14 = vsyncpa [#allocation5], 0
    // Predicated region
    $region2: #{contour_sample_refine_head.1} parent=1 // pred_check
      _
    $region3: #{contour_sample_refine_head.1} parent=1 // pred_check_branch
      %16 = sbr.rel (0) target = $region5
    $region4: #{contour_sample_refine_head.1} parent=1 // pred_region
      _
    $region5: #{contour_sample_refine_head.1} parent=1 // pred_fallthru
      _
    // Predicated region
    $region6: #{contour_sample_refine_head.1} parent=1 // pred_check
      _
    $region7: #{contour_sample_refine_head.1} parent=1 // pred_check_branch
      %18 = sbr.rel (0) target = $region9
    $region8: #{contour_sample_refine_head.1} parent=1 // pred_region
      %20 = vsyncadd [#allocation4], 0
      %s21 = sshll.u32 %s1, 4
      %s22 = int_to_ptr.hbm [resolvable:$true] %s21
      %s23 = sshll.u32 [#allocation3], 4
      %s24 = int_to_ptr.vmem [resolvable:$true] %s23
      %29 = dma.hbm_to_vmem [thread:$0]  %s22, 16384, %s24, [#allocation4], 512, 512, 32
    $region9: #{contour_sample_refine_head.1} parent=1 // pred_fallthru
      _
    // Predicated region
    $region10: #{contour_sample_refine_head.1} parent=1 // pred_check
      _
    $region11: #{contour_sample_refine_head.1} parent=1 // pred_check_branch
      %31 = sbr.rel (0) target = $region13
    $region12: #{contour_sample_refine_head.1} parent=1 // pred_region
      _
    $region13: #{contour_sample_refine_head.1} parent=1 // pred_fallthru
      _
    // Predicated region
    $region14: #{contour_sample_refine_head.1} parent=1 // pred_check
      _
    $region15: #{contour_sample_refine_head.1} parent=1 // pred_check_branch
      %33 = sbr.rel (0) target = $region17
    $region16: #{contour_sample_refine_head.1} parent=1 // pred_region
      %35 = vsyncadd [#allocation7], 0
      %s36 = sshll.u32 %s3, 4
      %s37 = int_to_ptr.hbm [resolvable:$true] %s36
      %s38 = sshll.u32 [#allocation6], 4
      %s39 = int_to_ptr.vmem [resolvable:$true] %s38
      %44 = dma.hbm_to_vmem [thread:$0]  %s37, 32768, %s39, [#allocation7], 256, 256, 16
    $region17: #{contour_sample_refine_head.1} parent=1 // pred_fallthru
      _
    // Predicated region
    $region18: #{contour_sample_refine_head.1} parent=1 // pred_check
      _
    $region19: #{contour_sample_refine_head.1} parent=1 // pred_check_branch
      %46 = sbr.rel (0) target = $region21
    $region20: #{contour_sample_refine_head.1} parent=1 // pred_region
      _
    $region21: #{contour_sample_refine_head.1} parent=1 // pred_fallthru
      _
    // Predicated region
    $region22: #{contour_sample_refine_head.1} parent=1 // pred_check
      _
    $region23: #{contour_sample_refine_head.1} parent=1 // pred_check_branch
      %48 = sbr.rel (0) target = $region25
    $region24: #{contour_sample_refine_head.1} parent=1 // pred_region
      _
    $region25: #{contour_sample_refine_head.1} parent=1 // pred_fallthru
      _
    // Predicated region
    $region26: #{contour_sample_refine_head.1} parent=1 // pred_check
      _
    $region27: #{contour_sample_refine_head.1} parent=1 // pred_check_branch
      %50 = sbr.rel (0) target = $region29
    $region28: #{contour_sample_refine_head.1} parent=1 // pred_region
      _
    $region29: #{contour_sample_refine_head.1} parent=1 // pred_fallthru
      _
    // Predicated region
    $region30: #{contour_sample_refine_head.1} parent=1 // pred_check
      _
    $region31: #{contour_sample_refine_head.1} parent=1 // pred_check_branch
      %52 = sbr.rel (0) target = $region33
    $region32: #{contour_sample_refine_head.1} parent=1 // pred_region
      %54 = dma.done [#allocation4], 16384
    $region33: #{contour_sample_refine_head.1} parent=1 // pred_fallthru
      _
    // Predicated region
    $region34: #{contour_sample_refine_head.1} parent=1 // pred_check
      _
    $region35: #{contour_sample_refine_head.1} parent=1 // pred_check_branch
      %56 = sbr.rel (0) target = $region37
    $region36: #{contour_sample_refine_head.1} parent=1 // pred_region
      %58 = dma.done [#allocation7], 32768
    $region37: #{contour_sample_refine_head.1} parent=1 // pred_fallthru
      _
    %p59 = scmp.eq.s32.totalorder 0, 0
    // Predicated region
    $region38: #{contour_sample_refine_head.1} parent=1 // pred_check
      %p60 = pneg %p59
    $region39: #{contour_sample_refine_head.1} parent=1 // pred_check_branch
      %62 = sbr.rel (%p60) target = $region41
    $region40: #{contour_sample_refine_head.1} parent=1 // pred_region
      %63 = vst [vmem:[#allocation2] sm:$0xff] 0.0
      %64 = vst [vmem:[#allocation2 + $0x8] sm:$0xff] 0.0
      %65 = vst [vmem:[#allocation2 + $0x10] sm:$0xff] 0.0
      %66 = vst [vmem:[#allocation2 + $0x18] sm:$0xff] 0.0
      %67 = vst [vmem:[#allocation2 + $0x20] sm:$0xff] 0.0
      %68 = vst [vmem:[#allocation2 + $0x28] sm:$0xff] 0.0
      %69 = vst [vmem:[#allocation2 + $0x30] sm:$0xff] 0.0
      %70 = vst [vmem:[#allocation2 + $0x38] sm:$0xff] 0.0
      %71 = vst [vmem:[#allocation2 + $0x40] sm:$0xff] 0.0
      %72 = vst [vmem:[#allocation2 + $0x48] sm:$0xff] 0.0
      %73 = vst [vmem:[#allocation2 + $0x50] sm:$0xff] 0.0
      %74 = vst [vmem:[#allocation2 + $0x58] sm:$0xff] 0.0
      %75 = vst [vmem:[#allocation2 + $0x60] sm:$0xff] 0.0
      %76 = vst [vmem:[#allocation2 + $0x68] sm:$0xff] 0.0
      %77 = vst [vmem:[#allocation2 + $0x70] sm:$0xff] 0.0
      %78 = vst [vmem:[#allocation2 + $0x78] sm:$0xff] 0.0
    $region41: #{contour_sample_refine_head.1} parent=1 // pred_fallthru
      _
    %v79 = vld [vmem:[#allocation2] sm:$0xff]
    %v80 = vld [vmem:[#allocation2 + $0x8] sm:$0xff]
    %v81 = vld [vmem:[#allocation2 + $0x10] sm:$0xff]
    %v82 = vld [vmem:[#allocation2 + $0x18] sm:$0xff]
    %v83 = vld [vmem:[#allocation2 + $0x20] sm:$0xff]
    %v84 = vld [vmem:[#allocation2 + $0x28] sm:$0xff]
    %v85 = vld [vmem:[#allocation2 + $0x30] sm:$0xff]
    %v86 = vld [vmem:[#allocation2 + $0x38] sm:$0xff]
    %v87 = vld [vmem:[#allocation2 + $0x40] sm:$0xff]
    %v88 = vld [vmem:[#allocation2 + $0x48] sm:$0xff]
    %v89 = vld [vmem:[#allocation2 + $0x50] sm:$0xff]
    %v90 = vld [vmem:[#allocation2 + $0x58] sm:$0xff]
    %v91 = vld [vmem:[#allocation2 + $0x60] sm:$0xff]
    %v92 = vld [vmem:[#allocation2 + $0x68] sm:$0xff]
    %v93 = vld [vmem:[#allocation2 + $0x70] sm:$0xff]
    %v94 = vld [vmem:[#allocation2 + $0x78] sm:$0xff]
    %v95 = vld [vmem:[%s0] sm:$0xff]
    %v96 = vld [vmem:[%s0 + $0x8] sm:$0xff]
    %v97 = vld [vmem:[#allocation3] sm:$0xff]
    %v98 = vld [vmem:[#allocation3 + $0x8] sm:$0xff]
    %v99 = vld [vmem:[#allocation3 + $0x10] sm:$0xff]
    %v100 = vld [vmem:[#allocation3 + $0x18] sm:$0xff]
    %v101 = vld [vmem:[#allocation3 + $0x20] sm:$0xff]
    %v102 = vld [vmem:[#allocation3 + $0x28] sm:$0xff]
    %v103 = vld [vmem:[#allocation3 + $0x30] sm:$0xff]
    %v104 = vld [vmem:[#allocation3 + $0x38] sm:$0xff]
    %v105 = vld [vmem:[#allocation3 + $0x40] sm:$0xff]
    %v106 = vld [vmem:[#allocation3 + $0x48] sm:$0xff]
    %v107 = vld [vmem:[#allocation3 + $0x50] sm:$0xff]
    %v108 = vld [vmem:[#allocation3 + $0x58] sm:$0xff]
    %v109 = vld [vmem:[#allocation3 + $0x60] sm:$0xff]
    %v110 = vld [vmem:[#allocation3 + $0x68] sm:$0xff]
    %v111 = vld [vmem:[#allocation3 + $0x70] sm:$0xff]
    %v112 = vld [vmem:[#allocation3 + $0x78] sm:$0xff]
    %v113 = vld [vmem:[#allocation3 + $0x80] sm:$0xff]
    %v114 = vld [vmem:[#allocation3 + $0x88] sm:$0xff]
    %v115 = vld [vmem:[#allocation3 + $0x90] sm:$0xff]
    %v116 = vld [vmem:[#allocation3 + $0x98] sm:$0xff]
    %v117 = vld [vmem:[#allocation3 + $0xa0] sm:$0xff]
    %v118 = vld [vmem:[#allocation3 + $0xa8] sm:$0xff]
    %v119 = vld [vmem:[#allocation3 + $0xb0] sm:$0xff]
    %v120 = vld [vmem:[#allocation3 + $0xb8] sm:$0xff]
    %v121 = vld [vmem:[#allocation3 + $0xc0] sm:$0xff]
    %v122 = vld [vmem:[#allocation3 + $0xc8] sm:$0xff]
    %v123 = vld [vmem:[#allocation3 + $0xd0] sm:$0xff]
    %v124 = vld [vmem:[#allocation3 + $0xd8] sm:$0xff]
    %v125 = vld [vmem:[#allocation3 + $0xe0] sm:$0xff]
    %v126 = vld [vmem:[#allocation3 + $0xe8] sm:$0xff]
    %v127 = vld [vmem:[#allocation3 + $0xf0] sm:$0xff]
    %v128 = vld [vmem:[#allocation3 + $0xf8] sm:$0xff]
    %v129 = vld [vmem:[#allocation3 + $0x100] sm:$0xff]
    %v130 = vld [vmem:[#allocation3 + $0x108] sm:$0xff]
    %v131 = vld [vmem:[#allocation3 + $0x110] sm:$0xff]
    %v132 = vld [vmem:[#allocation3 + $0x118] sm:$0xff]
    %v133 = vld [vmem:[#allocation3 + $0x120] sm:$0xff]
    %v134 = vld [vmem:[#allocation3 + $0x128] sm:$0xff]
    %v135 = vld [vmem:[#allocation3 + $0x130] sm:$0xff]
    %v136 = vld [vmem:[#allocation3 + $0x138] sm:$0xff]
    %v137 = vld [vmem:[#allocation3 + $0x140] sm:$0xff]
    %v138 = vld [vmem:[#allocation3 + $0x148] sm:$0xff]
    %v139 = vld [vmem:[#allocation3 + $0x150] sm:$0xff]
    %v140 = vld [vmem:[#allocation3 + $0x158] sm:$0xff]
    %v141 = vld [vmem:[#allocation3 + $0x160] sm:$0xff]
    %v142 = vld [vmem:[#allocation3 + $0x168] sm:$0xff]
    %v143 = vld [vmem:[#allocation3 + $0x170] sm:$0xff]
    %v144 = vld [vmem:[#allocation3 + $0x178] sm:$0xff]
    %v145 = vld [vmem:[#allocation3 + $0x180] sm:$0xff]
    %v146 = vld [vmem:[#allocation3 + $0x188] sm:$0xff]
    %v147 = vld [vmem:[#allocation3 + $0x190] sm:$0xff]
    %v148 = vld [vmem:[#allocation3 + $0x198] sm:$0xff]
    %v149 = vld [vmem:[#allocation3 + $0x1a0] sm:$0xff]
    %v150 = vld [vmem:[#allocation3 + $0x1a8] sm:$0xff]
    %v151 = vld [vmem:[#allocation3 + $0x1b0] sm:$0xff]
    %v152 = vld [vmem:[#allocation3 + $0x1b8] sm:$0xff]
    %v153 = vld [vmem:[#allocation3 + $0x1c0] sm:$0xff]
    %v154 = vld [vmem:[#allocation3 + $0x1c8] sm:$0xff]
    %v155 = vld [vmem:[#allocation3 + $0x1d0] sm:$0xff]
    %v156 = vld [vmem:[#allocation3 + $0x1d8] sm:$0xff]
    %v157 = vld [vmem:[#allocation3 + $0x1e0] sm:$0xff]
    %v158 = vld [vmem:[#allocation3 + $0x1e8] sm:$0xff]
    %v159 = vld [vmem:[#allocation3 + $0x1f0] sm:$0xff]
    %v160 = vld [vmem:[#allocation3 + $0x1f8] sm:$0xff]
    %v161 = vld [vmem:[#allocation3 + $0x200] sm:$0xff]
    %v162 = vld [vmem:[#allocation3 + $0x208] sm:$0xff]
    %v163 = vld [vmem:[#allocation3 + $0x210] sm:$0xff]
    %v164 = vld [vmem:[#allocation3 + $0x218] sm:$0xff]
    %v165 = vld [vmem:[#allocation3 + $0x220] sm:$0xff]
    %v166 = vld [vmem:[#allocation3 + $0x228] sm:$0xff]
    %v167 = vld [vmem:[#allocation3 + $0x230] sm:$0xff]
    %v168 = vld [vmem:[#allocation3 + $0x238] sm:$0xff]
    %v169 = vld [vmem:[#allocation3 + $0x240] sm:$0xff]
    %v170 = vld [vmem:[#allocation3 + $0x248] sm:$0xff]
    %v171 = vld [vmem:[#allocation3 + $0x250] sm:$0xff]
    %v172 = vld [vmem:[#allocation3 + $0x258] sm:$0xff]
    %v173 = vld [vmem:[#allocation3 + $0x260] sm:$0xff]
    %v174 = vld [vmem:[#allocation3 + $0x268] sm:$0xff]
    %v175 = vld [vmem:[#allocation3 + $0x270] sm:$0xff]
    %v176 = vld [vmem:[#allocation3 + $0x278] sm:$0xff]
    %v177 = vld [vmem:[#allocation3 + $0x280] sm:$0xff]
    %v178 = vld [vmem:[#allocation3 + $0x288] sm:$0xff]
    %v179 = vld [vmem:[#allocation3 + $0x290] sm:$0xff]
    %v180 = vld [vmem:[#allocation3 + $0x298] sm:$0xff]
    %v181 = vld [vmem:[#allocation3 + $0x2a0] sm:$0xff]
    %v182 = vld [vmem:[#allocation3 + $0x2a8] sm:$0xff]
    %v183 = vld [vmem:[#allocation3 + $0x2b0] sm:$0xff]
    %v184 = vld [vmem:[#allocation3 + $0x2b8] sm:$0xff]
    %v185 = vld [vmem:[#allocation3 + $0x2c0] sm:$0xff]
    %v186 = vld [vmem:[#allocation3 + $0x2c8] sm:$0xff]
    %v187 = vld [vmem:[#allocation3 + $0x2d0] sm:$0xff]
    %v188 = vld [vmem:[#allocation3 + $0x2d8] sm:$0xff]
    %v189 = vld [vmem:[#allocation3 + $0x2e0] sm:$0xff]
    %v190 = vld [vmem:[#allocation3 + $0x2e8] sm:$0xff]
    %v191 = vld [vmem:[#allocation3 + $0x2f0] sm:$0xff]
    %v192 = vld [vmem:[#allocation3 + $0x2f8] sm:$0xff]
    %v193 = vld [vmem:[#allocation3 + $0x300] sm:$0xff]
    %v194 = vld [vmem:[#allocation3 + $0x308] sm:$0xff]
    %v195 = vld [vmem:[#allocation3 + $0x310] sm:$0xff]
    %v196 = vld [vmem:[#allocation3 + $0x318] sm:$0xff]
    %v197 = vld [vmem:[#allocation3 + $0x320] sm:$0xff]
    %v198 = vld [vmem:[#allocation3 + $0x328] sm:$0xff]
    %v199 = vld [vmem:[#allocation3 + $0x330] sm:$0xff]
    %v200 = vld [vmem:[#allocation3 + $0x338] sm:$0xff]
    %v201 = vld [vmem:[#allocation3 + $0x340] sm:$0xff]
    %v202 = vld [vmem:[#allocation3 + $0x348] sm:$0xff]
    %v203 = vld [vmem:[#allocation3 + $0x350] sm:$0xff]
    %v204 = vld [vmem:[#allocation3 + $0x358] sm:$0xff]
    %v205 = vld [vmem:[#allocation3 + $0x360] sm:$0xff]
    %v206 = vld [vmem:[#allocation3 + $0x368] sm:$0xff]
    %v207 = vld [vmem:[#allocation3 + $0x370] sm:$0xff]
    %v208 = vld [vmem:[#allocation3 + $0x378] sm:$0xff]
    %v209 = vld [vmem:[#allocation3 + $0x380] sm:$0xff]
    %v210 = vld [vmem:[#allocation3 + $0x388] sm:$0xff]
    %v211 = vld [vmem:[#allocation3 + $0x390] sm:$0xff]
    %v212 = vld [vmem:[#allocation3 + $0x398] sm:$0xff]
    %v213 = vld [vmem:[#allocation3 + $0x3a0] sm:$0xff]
    %v214 = vld [vmem:[#allocation3 + $0x3a8] sm:$0xff]
    %v215 = vld [vmem:[#allocation3 + $0x3b0] sm:$0xff]
    %v216 = vld [vmem:[#allocation3 + $0x3b8] sm:$0xff]
    %v217 = vld [vmem:[#allocation3 + $0x3c0] sm:$0xff]
    %v218 = vld [vmem:[#allocation3 + $0x3c8] sm:$0xff]
    %v219 = vld [vmem:[#allocation3 + $0x3d0] sm:$0xff]
    %v220 = vld [vmem:[#allocation3 + $0x3d8] sm:$0xff]
    %v221 = vld [vmem:[#allocation3 + $0x3e0] sm:$0xff]
    %v222 = vld [vmem:[#allocation3 + $0x3e8] sm:$0xff]
    %v223 = vld [vmem:[#allocation3 + $0x3f0] sm:$0xff]
    %v224 = vld [vmem:[#allocation3 + $0x3f8] sm:$0xff]
    %v227 = vunpack.c.l.b16 %v95
    %v228 = vunpack.c.h.b16 %v95
    %v229 = vunpack.c.l.b16 %v96
    %v230 = vunpack.c.h.b16 %v96
    %v231 = vpack.c.b16 %v229, %v227
    %v232 = vpack.c.b16 %v230, %v228
    %v363 = vunpack.c.l.b16 %v97
    %v364 = vunpack.c.h.b16 %v97
    %v365 = vunpack.c.l.b16 %v98
    %v366 = vunpack.c.h.b16 %v98
    %v367 = vunpack.c.l.b16 %v99
    %v368 = vunpack.c.h.b16 %v99
    %v369 = vunpack.c.l.b16 %v100
    %v370 = vunpack.c.h.b16 %v100
    %v371 = vunpack.c.l.b16 %v101
    %v372 = vunpack.c.h.b16 %v101
    %v373 = vunpack.c.l.b16 %v102
    %v374 = vunpack.c.h.b16 %v102
    %v375 = vunpack.c.l.b16 %v103
    %v376 = vunpack.c.h.b16 %v103
    %v377 = vunpack.c.l.b16 %v104
    %v378 = vunpack.c.h.b16 %v104
    %v379 = vunpack.c.l.b16 %v105
    %v380 = vunpack.c.h.b16 %v105
    %v381 = vunpack.c.l.b16 %v106
    %v382 = vunpack.c.h.b16 %v106
    %v383 = vunpack.c.l.b16 %v107
    %v384 = vunpack.c.h.b16 %v107
    %v385 = vunpack.c.l.b16 %v108
    %v386 = vunpack.c.h.b16 %v108
    %v387 = vunpack.c.l.b16 %v109
    %v388 = vunpack.c.h.b16 %v109
    %v389 = vunpack.c.l.b16 %v110
    %v390 = vunpack.c.h.b16 %v110
    %v391 = vunpack.c.l.b16 %v111
    %v392 = vunpack.c.h.b16 %v111
    %v393 = vunpack.c.l.b16 %v112
    %v394 = vunpack.c.h.b16 %v112
    %v395 = vunpack.c.l.b16 %v113
    %v396 = vunpack.c.h.b16 %v113
    %v397 = vunpack.c.l.b16 %v114
    %v398 = vunpack.c.h.b16 %v114
    %v399 = vunpack.c.l.b16 %v115
    %v400 = vunpack.c.h.b16 %v115
    %v401 = vunpack.c.l.b16 %v116
    %v402 = vunpack.c.h.b16 %v116
    %v403 = vunpack.c.l.b16 %v117
    %v404 = vunpack.c.h.b16 %v117
    %v405 = vunpack.c.l.b16 %v118
    %v406 = vunpack.c.h.b16 %v118
    %v407 = vunpack.c.l.b16 %v119
    %v408 = vunpack.c.h.b16 %v119
    %v409 = vunpack.c.l.b16 %v120
    %v410 = vunpack.c.h.b16 %v120
    %v411 = vunpack.c.l.b16 %v121
    %v412 = vunpack.c.h.b16 %v121
    %v413 = vunpack.c.l.b16 %v122
    %v414 = vunpack.c.h.b16 %v122
    %v415 = vunpack.c.l.b16 %v123
    %v416 = vunpack.c.h.b16 %v123
    %v417 = vunpack.c.l.b16 %v124
    %v418 = vunpack.c.h.b16 %v124
    %v419 = vunpack.c.l.b16 %v125
    %v420 = vunpack.c.h.b16 %v125
    %v421 = vunpack.c.l.b16 %v126
    %v422 = vunpack.c.h.b16 %v126
    %v423 = vunpack.c.l.b16 %v127
    %v424 = vunpack.c.h.b16 %v127
    %v425 = vunpack.c.l.b16 %v128
    %v426 = vunpack.c.h.b16 %v128
    %v427 = vunpack.c.l.b16 %v129
    %v428 = vunpack.c.h.b16 %v129
    %v429 = vunpack.c.l.b16 %v130
    %v430 = vunpack.c.h.b16 %v130
    %v431 = vunpack.c.l.b16 %v131
    %v432 = vunpack.c.h.b16 %v131
    %v433 = vunpack.c.l.b16 %v132
    %v434 = vunpack.c.h.b16 %v132
    %v435 = vunpack.c.l.b16 %v133
    %v436 = vunpack.c.h.b16 %v133
    %v437 = vunpack.c.l.b16 %v134
    %v438 = vunpack.c.h.b16 %v134
    %v439 = vunpack.c.l.b16 %v135
    %v440 = vunpack.c.h.b16 %v135
    %v441 = vunpack.c.l.b16 %v136
    %v442 = vunpack.c.h.b16 %v136
    %v443 = vunpack.c.l.b16 %v137
    %v444 = vunpack.c.h.b16 %v137
    %v445 = vunpack.c.l.b16 %v138
    %v446 = vunpack.c.h.b16 %v138
    %v447 = vunpack.c.l.b16 %v139
    %v448 = vunpack.c.h.b16 %v139
    %v449 = vunpack.c.l.b16 %v140
    %v450 = vunpack.c.h.b16 %v140
    %v451 = vunpack.c.l.b16 %v141
    %v452 = vunpack.c.h.b16 %v141
    %v453 = vunpack.c.l.b16 %v142
    %v454 = vunpack.c.h.b16 %v142
    %v455 = vunpack.c.l.b16 %v143
    %v456 = vunpack.c.h.b16 %v143
    %v457 = vunpack.c.l.b16 %v144
    %v458 = vunpack.c.h.b16 %v144
    %v459 = vunpack.c.l.b16 %v145
    %v460 = vunpack.c.h.b16 %v145
    %v461 = vunpack.c.l.b16 %v146
    %v462 = vunpack.c.h.b16 %v146
    %v463 = vunpack.c.l.b16 %v147
    %v464 = vunpack.c.h.b16 %v147
    %v465 = vunpack.c.l.b16 %v148
    %v466 = vunpack.c.h.b16 %v148
    %v467 = vunpack.c.l.b16 %v149
    %v468 = vunpack.c.h.b16 %v149
    %v469 = vunpack.c.l.b16 %v150
    %v470 = vunpack.c.h.b16 %v150
    %v471 = vunpack.c.l.b16 %v151
    %v472 = vunpack.c.h.b16 %v151
    %v473 = vunpack.c.l.b16 %v152
    %v474 = vunpack.c.h.b16 %v152
    %v475 = vunpack.c.l.b16 %v153
    %v476 = vunpack.c.h.b16 %v153
    %v477 = vunpack.c.l.b16 %v154
    %v478 = vunpack.c.h.b16 %v154
    %v479 = vunpack.c.l.b16 %v155
    %v480 = vunpack.c.h.b16 %v155
    %v481 = vunpack.c.l.b16 %v156
    %v482 = vunpack.c.h.b16 %v156
    %v483 = vunpack.c.l.b16 %v157
    %v484 = vunpack.c.h.b16 %v157
    %v485 = vunpack.c.l.b16 %v158
    %v486 = vunpack.c.h.b16 %v158
    %v487 = vunpack.c.l.b16 %v159
    %v488 = vunpack.c.h.b16 %v159
    %v489 = vunpack.c.l.b16 %v160
    %v490 = vunpack.c.h.b16 %v160
    %v491 = vunpack.c.l.b16 %v161
    %v492 = vunpack.c.h.b16 %v161
    %v493 = vunpack.c.l.b16 %v162
    %v494 = vunpack.c.h.b16 %v162
    %v495 = vunpack.c.l.b16 %v163
    %v496 = vunpack.c.h.b16 %v163
    %v497 = vunpack.c.l.b16 %v164
    %v498 = vunpack.c.h.b16 %v164
    %v499 = vunpack.c.l.b16 %v165
    %v500 = vunpack.c.h.b16 %v165
    %v501 = vunpack.c.l.b16 %v166
    %v502 = vunpack.c.h.b16 %v166
    %v503 = vunpack.c.l.b16 %v167
    %v504 = vunpack.c.h.b16 %v167
    %v505 = vunpack.c.l.b16 %v168
    %v506 = vunpack.c.h.b16 %v168
    %v507 = vunpack.c.l.b16 %v169
    %v508 = vunpack.c.h.b16 %v169
    %v509 = vunpack.c.l.b16 %v170
    %v510 = vunpack.c.h.b16 %v170
    %v511 = vunpack.c.l.b16 %v171
    %v512 = vunpack.c.h.b16 %v171
    %v513 = vunpack.c.l.b16 %v172
    %v514 = vunpack.c.h.b16 %v172
    %v515 = vunpack.c.l.b16 %v173
    %v516 = vunpack.c.h.b16 %v173
    %v517 = vunpack.c.l.b16 %v174
    %v518 = vunpack.c.h.b16 %v174
    %v519 = vunpack.c.l.b16 %v175
    %v520 = vunpack.c.h.b16 %v175
    %v521 = vunpack.c.l.b16 %v176
    %v522 = vunpack.c.h.b16 %v176
    %v523 = vunpack.c.l.b16 %v177
    %v524 = vunpack.c.h.b16 %v177
    %v525 = vunpack.c.l.b16 %v178
    %v526 = vunpack.c.h.b16 %v178
    %v527 = vunpack.c.l.b16 %v179
    %v528 = vunpack.c.h.b16 %v179
    %v529 = vunpack.c.l.b16 %v180
    %v530 = vunpack.c.h.b16 %v180
    %v531 = vunpack.c.l.b16 %v181
    %v532 = vunpack.c.h.b16 %v181
    %v533 = vunpack.c.l.b16 %v182
    %v534 = vunpack.c.h.b16 %v182
    %v535 = vunpack.c.l.b16 %v183
    %v536 = vunpack.c.h.b16 %v183
    %v537 = vunpack.c.l.b16 %v184
    %v538 = vunpack.c.h.b16 %v184
    %v539 = vunpack.c.l.b16 %v185
    %v540 = vunpack.c.h.b16 %v185
    %v541 = vunpack.c.l.b16 %v186
    %v542 = vunpack.c.h.b16 %v186
    %v543 = vunpack.c.l.b16 %v187
    %v544 = vunpack.c.h.b16 %v187
    %v545 = vunpack.c.l.b16 %v188
    %v546 = vunpack.c.h.b16 %v188
    %v547 = vunpack.c.l.b16 %v189
    %v548 = vunpack.c.h.b16 %v189
    %v549 = vunpack.c.l.b16 %v190
    %v550 = vunpack.c.h.b16 %v190
    %v551 = vunpack.c.l.b16 %v191
    %v552 = vunpack.c.h.b16 %v191
    %v553 = vunpack.c.l.b16 %v192
    %v554 = vunpack.c.h.b16 %v192
    %v555 = vunpack.c.l.b16 %v193
    %v556 = vunpack.c.h.b16 %v193
    %v557 = vunpack.c.l.b16 %v194
    %v558 = vunpack.c.h.b16 %v194
    %v559 = vunpack.c.l.b16 %v195
    %v560 = vunpack.c.h.b16 %v195
    %v561 = vunpack.c.l.b16 %v196
    %v562 = vunpack.c.h.b16 %v196
    %v563 = vunpack.c.l.b16 %v197
    %v564 = vunpack.c.h.b16 %v197
    %v565 = vunpack.c.l.b16 %v198
    %v566 = vunpack.c.h.b16 %v198
    %v567 = vunpack.c.l.b16 %v199
    %v568 = vunpack.c.h.b16 %v199
    %v569 = vunpack.c.l.b16 %v200
    %v570 = vunpack.c.h.b16 %v200
    %v571 = vunpack.c.l.b16 %v201
    %v572 = vunpack.c.h.b16 %v201
    %v573 = vunpack.c.l.b16 %v202
    %v574 = vunpack.c.h.b16 %v202
    %v575 = vunpack.c.l.b16 %v203
    %v576 = vunpack.c.h.b16 %v203
    %v577 = vunpack.c.l.b16 %v204
    %v578 = vunpack.c.h.b16 %v204
    %v579 = vunpack.c.l.b16 %v205
    %v580 = vunpack.c.h.b16 %v205
    %v581 = vunpack.c.l.b16 %v206
    %v582 = vunpack.c.h.b16 %v206
    %v583 = vunpack.c.l.b16 %v207
    %v584 = vunpack.c.h.b16 %v207
    %v585 = vunpack.c.l.b16 %v208
    %v586 = vunpack.c.h.b16 %v208
    %v587 = vunpack.c.l.b16 %v209
    %v588 = vunpack.c.h.b16 %v209
    %v589 = vunpack.c.l.b16 %v210
    %v590 = vunpack.c.h.b16 %v210
    %v591 = vunpack.c.l.b16 %v211
    %v592 = vunpack.c.h.b16 %v211
    %v593 = vunpack.c.l.b16 %v212
    %v594 = vunpack.c.h.b16 %v212
    %v595 = vunpack.c.l.b16 %v213
    %v596 = vunpack.c.h.b16 %v213
    %v597 = vunpack.c.l.b16 %v214
    %v598 = vunpack.c.h.b16 %v214
    %v599 = vunpack.c.l.b16 %v215
    %v600 = vunpack.c.h.b16 %v215
    %v601 = vunpack.c.l.b16 %v216
    %v602 = vunpack.c.h.b16 %v216
    %v603 = vunpack.c.l.b16 %v217
    %v604 = vunpack.c.h.b16 %v217
    %v605 = vunpack.c.l.b16 %v218
    %v606 = vunpack.c.h.b16 %v218
    %v607 = vunpack.c.l.b16 %v219
    %v608 = vunpack.c.h.b16 %v219
    %v609 = vunpack.c.l.b16 %v220
    %v610 = vunpack.c.h.b16 %v220
    %v611 = vunpack.c.l.b16 %v221
    %v612 = vunpack.c.h.b16 %v221
    %v613 = vunpack.c.l.b16 %v222
    %v614 = vunpack.c.h.b16 %v222
    %v615 = vunpack.c.l.b16 %v223
    %v616 = vunpack.c.h.b16 %v223
    %v617 = vunpack.c.l.b16 %v224
    %v618 = vunpack.c.h.b16 %v224
    %v619 = vpack.c.b16 %v371, %v363
    %v620 = vpack.c.b16 %v372, %v364
    %v621 = vpack.c.b16 %v373, %v365
    %v622 = vpack.c.b16 %v374, %v366
    %v623 = vpack.c.b16 %v375, %v367
    %v624 = vpack.c.b16 %v376, %v368
    %v625 = vpack.c.b16 %v377, %v369
    %v626 = vpack.c.b16 %v378, %v370
    %v627 = vpack.c.b16 %v387, %v379
    %v628 = vpack.c.b16 %v388, %v380
    %v629 = vpack.c.b16 %v389, %v381
    %v630 = vpack.c.b16 %v390, %v382
    %v631 = vpack.c.b16 %v391, %v383
    %v632 = vpack.c.b16 %v392, %v384
    %v633 = vpack.c.b16 %v393, %v385
    %v634 = vpack.c.b16 %v394, %v386
    %v635 = vpack.c.b16 %v403, %v395
    %v636 = vpack.c.b16 %v404, %v396
    %v637 = vpack.c.b16 %v405, %v397
    %v638 = vpack.c.b16 %v406, %v398
    %v639 = vpack.c.b16 %v407, %v399
    %v640 = vpack.c.b16 %v408, %v400
    %v641 = vpack.c.b16 %v409, %v401
    %v642 = vpack.c.b16 %v410, %v402
    %v643 = vpack.c.b16 %v419, %v411
    %v644 = vpack.c.b16 %v420, %v412
    %v645 = vpack.c.b16 %v421, %v413
    %v646 = vpack.c.b16 %v422, %v414
    %v647 = vpack.c.b16 %v423, %v415
    %v648 = vpack.c.b16 %v424, %v416
    %v649 = vpack.c.b16 %v425, %v417
    %v650 = vpack.c.b16 %v426, %v418
    %v651 = vpack.c.b16 %v435, %v427
    %v652 = vpack.c.b16 %v436, %v428
    %v653 = vpack.c.b16 %v437, %v429
    %v654 = vpack.c.b16 %v438, %v430
    %v655 = vpack.c.b16 %v439, %v431
    %v656 = vpack.c.b16 %v440, %v432
    %v657 = vpack.c.b16 %v441, %v433
    %v658 = vpack.c.b16 %v442, %v434
    %v659 = vpack.c.b16 %v451, %v443
    %v660 = vpack.c.b16 %v452, %v444
    %v661 = vpack.c.b16 %v453, %v445
    %v662 = vpack.c.b16 %v454, %v446
    %v663 = vpack.c.b16 %v455, %v447
    %v664 = vpack.c.b16 %v456, %v448
    %v665 = vpack.c.b16 %v457, %v449
    %v666 = vpack.c.b16 %v458, %v450
    %v667 = vpack.c.b16 %v467, %v459
    %v668 = vpack.c.b16 %v468, %v460
    %v669 = vpack.c.b16 %v469, %v461
    %v670 = vpack.c.b16 %v470, %v462
    %v671 = vpack.c.b16 %v471, %v463
    %v672 = vpack.c.b16 %v472, %v464
    %v673 = vpack.c.b16 %v473, %v465
    %v674 = vpack.c.b16 %v474, %v466
    %v675 = vpack.c.b16 %v483, %v475
    %v676 = vpack.c.b16 %v484, %v476
    %v677 = vpack.c.b16 %v485, %v477
    %v678 = vpack.c.b16 %v486, %v478
    %v679 = vpack.c.b16 %v487, %v479
    %v680 = vpack.c.b16 %v488, %v480
    %v681 = vpack.c.b16 %v489, %v481
    %v682 = vpack.c.b16 %v490, %v482
    %v683 = vpack.c.b16 %v499, %v491
    %v684 = vpack.c.b16 %v500, %v492
    %v685 = vpack.c.b16 %v501, %v493
    %v686 = vpack.c.b16 %v502, %v494
    %v687 = vpack.c.b16 %v503, %v495
    %v688 = vpack.c.b16 %v504, %v496
    %v689 = vpack.c.b16 %v505, %v497
    %v690 = vpack.c.b16 %v506, %v498
    %v691 = vpack.c.b16 %v515, %v507
    %v692 = vpack.c.b16 %v516, %v508
    %v693 = vpack.c.b16 %v517, %v509
    %v694 = vpack.c.b16 %v518, %v510
    %v695 = vpack.c.b16 %v519, %v511
    %v696 = vpack.c.b16 %v520, %v512
    %v697 = vpack.c.b16 %v521, %v513
    %v698 = vpack.c.b16 %v522, %v514
    %v699 = vpack.c.b16 %v531, %v523
    %v700 = vpack.c.b16 %v532, %v524
    %v701 = vpack.c.b16 %v533, %v525
    %v702 = vpack.c.b16 %v534, %v526
    %v703 = vpack.c.b16 %v535, %v527
    %v704 = vpack.c.b16 %v536, %v528
    %v705 = vpack.c.b16 %v537, %v529
    %v706 = vpack.c.b16 %v538, %v530
    %v707 = vpack.c.b16 %v547, %v539
    %v708 = vpack.c.b16 %v548, %v540
    %v709 = vpack.c.b16 %v549, %v541
    %v710 = vpack.c.b16 %v550, %v542
    %v711 = vpack.c.b16 %v551, %v543
    %v712 = vpack.c.b16 %v552, %v544
    %v713 = vpack.c.b16 %v553, %v545
    %v714 = vpack.c.b16 %v554, %v546
    %v715 = vpack.c.b16 %v563, %v555
    %v716 = vpack.c.b16 %v564, %v556
    %v717 = vpack.c.b16 %v565, %v557
    %v718 = vpack.c.b16 %v566, %v558
    %v719 = vpack.c.b16 %v567, %v559
    %v720 = vpack.c.b16 %v568, %v560
    %v721 = vpack.c.b16 %v569, %v561
    %v722 = vpack.c.b16 %v570, %v562
    %v723 = vpack.c.b16 %v579, %v571
    %v724 = vpack.c.b16 %v580, %v572
    %v725 = vpack.c.b16 %v581, %v573
    %v726 = vpack.c.b16 %v582, %v574
    %v727 = vpack.c.b16 %v583, %v575
    %v728 = vpack.c.b16 %v584, %v576
    %v729 = vpack.c.b16 %v585, %v577
    %v730 = vpack.c.b16 %v586, %v578
    %v731 = vpack.c.b16 %v595, %v587
    %v732 = vpack.c.b16 %v596, %v588
    %v733 = vpack.c.b16 %v597, %v589
    %v734 = vpack.c.b16 %v598, %v590
    %v735 = vpack.c.b16 %v599, %v591
    %v736 = vpack.c.b16 %v600, %v592
    %v737 = vpack.c.b16 %v601, %v593
    %v738 = vpack.c.b16 %v602, %v594
    %v739 = vpack.c.b16 %v611, %v603
    %v740 = vpack.c.b16 %v612, %v604
    %v741 = vpack.c.b16 %v613, %v605
    %v742 = vpack.c.b16 %v614, %v606
    %v743 = vpack.c.b16 %v615, %v607
    %v744 = vpack.c.b16 %v616, %v608
    %v745 = vpack.c.b16 %v617, %v609
    %v746 = vpack.c.b16 %v618, %v610
    %875 = vmatpush.bf16.msra.mxu0 %v675
    %876 = vmatpush.bf16.msra.mxu0 %v667
    %877 = vmatpush.bf16.msra.mxu0 %v659
    %878 = vmatpush.bf16.msra.mxu0 %v651
    %879 = vmatpush.bf16.msra.mxu0 %v643
    %880 = vmatpush.bf16.msra.mxu0 %v635
    %881 = vmatpush.bf16.msra.mxu0 %v627
    %882 = vmatpush.bf16.msra.mxu0 %v619
    %883 = vmatmul.bf16.gmra.mxu0 %v231
    %v884 = vpop.f32.mrf.mxu0
    %v885 = vadd.f32 0.0, %v884
    %v886 = vpop.f32.mrf.mxu0
    %v887 = vadd.f32 0.0, %v886
    %888 = vdwg.mxu0
    %889 = vmatpush.bf16.msra.mxu0 %v739
    %890 = vmatpush.bf16.msra.mxu0 %v731
    %891 = vmatpush.bf16.msra.mxu0 %v723
    %892 = vmatpush.bf16.msra.mxu0 %v715
    %893 = vmatpush.bf16.msra.mxu0 %v707
    %894 = vmatpush.bf16.msra.mxu0 %v699
    %895 = vmatpush.bf16.msra.mxu0 %v691
    %896 = vmatpush.bf16.msra.mxu0 %v683
    %897 = vmatmul.bf16.gmra.mxu0 %v232
    %v898 = vpop.f32.mrf.mxu0
    %v899 = vadd.f32 %v885, %v898
    %v900 = vpop.f32.mrf.mxu0
    %v901 = vadd.f32 %v887, %v900
    %902 = vdwg.mxu0
    %903 = vmatpush.bf16.msra.mxu0 %v676
    %904 = vmatpush.bf16.msra.mxu0 %v668
    %905 = vmatpush.bf16.msra.mxu0 %v660
    %906 = vmatpush.bf16.msra.mxu0 %v652
    %907 = vmatpush.bf16.msra.mxu0 %v644
    %908 = vmatpush.bf16.msra.mxu0 %v636
    %909 = vmatpush.bf16.msra.mxu0 %v628
    %910 = vmatpush.bf16.msra.mxu0 %v620
    %911 = vmatmul.bf16.gmra.mxu0 %v231
    %v912 = vpop.f32.mrf.mxu0
    %v913 = vadd.f32 0.0, %v912
    %v914 = vpop.f32.mrf.mxu0
    %v915 = vadd.f32 0.0, %v914
    %916 = vdwg.mxu0
    %917 = vmatpush.bf16.msra.mxu0 %v740
    %918 = vmatpush.bf16.msra.mxu0 %v732
    %919 = vmatpush.bf16.msra.mxu0 %v724
    %920 = vmatpush.bf16.msra.mxu0 %v716
    %921 = vmatpush.bf16.msra.mxu0 %v708
    %922 = vmatpush.bf16.msra.mxu0 %v700
    %923 = vmatpush.bf16.msra.mxu0 %v692
    %924 = vmatpush.bf16.msra.mxu0 %v684
    %925 = vmatmul.bf16.gmra.mxu0 %v232
    %v926 = vpop.f32.mrf.mxu0
    %v927 = vadd.f32 %v913, %v926
    %v928 = vpop.f32.mrf.mxu0
    %v929 = vadd.f32 %v915, %v928
    %930 = vdwg.mxu0
    %931 = vmatpush.bf16.msra.mxu0 %v677
    %932 = vmatpush.bf16.msra.mxu0 %v669
    %933 = vmatpush.bf16.msra.mxu0 %v661
    %934 = vmatpush.bf16.msra.mxu0 %v653
    %935 = vmatpush.bf16.msra.mxu0 %v645
    %936 = vmatpush.bf16.msra.mxu0 %v637
    %937 = vmatpush.bf16.msra.mxu0 %v629
    %938 = vmatpush.bf16.msra.mxu0 %v621
    %939 = vmatmul.bf16.gmra.mxu0 %v231
    %v940 = vpop.f32.mrf.mxu0
    %v941 = vadd.f32 0.0, %v940
    %v942 = vpop.f32.mrf.mxu0
    %v943 = vadd.f32 0.0, %v942
    %944 = vdwg.mxu0
    %945 = vmatpush.bf16.msra.mxu0 %v741
    %946 = vmatpush.bf16.msra.mxu0 %v733
    %947 = vmatpush.bf16.msra.mxu0 %v725
    %948 = vmatpush.bf16.msra.mxu0 %v717
    %949 = vmatpush.bf16.msra.mxu0 %v709
    %950 = vmatpush.bf16.msra.mxu0 %v701
    %951 = vmatpush.bf16.msra.mxu0 %v693
    %952 = vmatpush.bf16.msra.mxu0 %v685
    %953 = vmatmul.bf16.gmra.mxu0 %v232
    %v954 = vpop.f32.mrf.mxu0
    %v955 = vadd.f32 %v941, %v954
    %v956 = vpop.f32.mrf.mxu0
    %v957 = vadd.f32 %v943, %v956
    %958 = vdwg.mxu0
    %959 = vmatpush.bf16.msra.mxu0 %v678
    %960 = vmatpush.bf16.msra.mxu0 %v670
    %961 = vmatpush.bf16.msra.mxu0 %v662
    %962 = vmatpush.bf16.msra.mxu0 %v654
    %963 = vmatpush.bf16.msra.mxu0 %v646
    %964 = vmatpush.bf16.msra.mxu0 %v638
    %965 = vmatpush.bf16.msra.mxu0 %v630
    %966 = vmatpush.bf16.msra.mxu0 %v622
    %967 = vmatmul.bf16.gmra.mxu0 %v231
    %v968 = vpop.f32.mrf.mxu0
    %v969 = vadd.f32 0.0, %v968
    %v970 = vpop.f32.mrf.mxu0
    %v971 = vadd.f32 0.0, %v970
    %972 = vdwg.mxu0
    %973 = vmatpush.bf16.msra.mxu0 %v742
    %974 = vmatpush.bf16.msra.mxu0 %v734
    %975 = vmatpush.bf16.msra.mxu0 %v726
    %976 = vmatpush.bf16.msra.mxu0 %v718
    %977 = vmatpush.bf16.msra.mxu0 %v710
    %978 = vmatpush.bf16.msra.mxu0 %v702
    %979 = vmatpush.bf16.msra.mxu0 %v694
    %980 = vmatpush.bf16.msra.mxu0 %v686
    %981 = vmatmul.bf16.gmra.mxu0 %v232
    %v982 = vpop.f32.mrf.mxu0
    %v983 = vadd.f32 %v969, %v982
    %v984 = vpop.f32.mrf.mxu0
    %v985 = vadd.f32 %v971, %v984
    %986 = vdwg.mxu0
    %987 = vmatpush.bf16.msra.mxu0 %v679
    %988 = vmatpush.bf16.msra.mxu0 %v671
    %989 = vmatpush.bf16.msra.mxu0 %v663
    %990 = vmatpush.bf16.msra.mxu0 %v655
    %991 = vmatpush.bf16.msra.mxu0 %v647
    %992 = vmatpush.bf16.msra.mxu0 %v639
    %993 = vmatpush.bf16.msra.mxu0 %v631
    %994 = vmatpush.bf16.msra.mxu0 %v623
    %995 = vmatmul.bf16.gmra.mxu0 %v231
    %v996 = vpop.f32.mrf.mxu0
    %v997 = vadd.f32 0.0, %v996
    %v998 = vpop.f32.mrf.mxu0
    %v999 = vadd.f32 0.0, %v998
    %1000 = vdwg.mxu0
    %1001 = vmatpush.bf16.msra.mxu0 %v743
    %1002 = vmatpush.bf16.msra.mxu0 %v735
    %1003 = vmatpush.bf16.msra.mxu0 %v727
    %1004 = vmatpush.bf16.msra.mxu0 %v719
    %1005 = vmatpush.bf16.msra.mxu0 %v711
    %1006 = vmatpush.bf16.msra.mxu0 %v703
    %1007 = vmatpush.bf16.msra.mxu0 %v695
    %1008 = vmatpush.bf16.msra.mxu0 %v687
    %1009 = vmatmul.bf16.gmra.mxu0 %v232
    %v1010 = vpop.f32.mrf.mxu0
    %v1011 = vadd.f32 %v997, %v1010
    %v1012 = vpop.f32.mrf.mxu0
    %v1013 = vadd.f32 %v999, %v1012
    %1014 = vdwg.mxu0
    %1015 = vmatpush.bf16.msra.mxu0 %v680
    %1016 = vmatpush.bf16.msra.mxu0 %v672
    %1017 = vmatpush.bf16.msra.mxu0 %v664
    %1018 = vmatpush.bf16.msra.mxu0 %v656
    %1019 = vmatpush.bf16.msra.mxu0 %v648
    %1020 = vmatpush.bf16.msra.mxu0 %v640
    %1021 = vmatpush.bf16.msra.mxu0 %v632
    %1022 = vmatpush.bf16.msra.mxu0 %v624
    %1023 = vmatmul.bf16.gmra.mxu0 %v231
    %v1024 = vpop.f32.mrf.mxu0
    %v1025 = vadd.f32 0.0, %v1024
    %v1026 = vpop.f32.mrf.mxu0
    %v1027 = vadd.f32 0.0, %v1026
    %1028 = vdwg.mxu0
    %1029 = vmatpush.bf16.msra.mxu0 %v744
    %1030 = vmatpush.bf16.msra.mxu0 %v736
    %1031 = vmatpush.bf16.msra.mxu0 %v728
    %1032 = vmatpush.bf16.msra.mxu0 %v720
    %1033 = vmatpush.bf16.msra.mxu0 %v712
    %1034 = vmatpush.bf16.msra.mxu0 %v704
    %1035 = vmatpush.bf16.msra.mxu0 %v696
    %1036 = vmatpush.bf16.msra.mxu0 %v688
    %1037 = vmatmul.bf16.gmra.mxu0 %v232
    %v1038 = vpop.f32.mrf.mxu0
    %v1039 = vadd.f32 %v1025, %v1038
    %v1040 = vpop.f32.mrf.mxu0
    %v1041 = vadd.f32 %v1027, %v1040
    %1042 = vdwg.mxu0
    %1043 = vmatpush.bf16.msra.mxu0 %v681
    %1044 = vmatpush.bf16.msra.mxu0 %v673
    %1045 = vmatpush.bf16.msra.mxu0 %v665
    %1046 = vmatpush.bf16.msra.mxu0 %v657
    %1047 = vmatpush.bf16.msra.mxu0 %v649
    %1048 = vmatpush.bf16.msra.mxu0 %v641
    %1049 = vmatpush.bf16.msra.mxu0 %v633
    %1050 = vmatpush.bf16.msra.mxu0 %v625
    %1051 = vmatmul.bf16.gmra.mxu0 %v231
    %v1052 = vpop.f32.mrf.mxu0
    %v1053 = vadd.f32 0.0, %v1052
    %v1054 = vpop.f32.mrf.mxu0
    %v1055 = vadd.f32 0.0, %v1054
    %1056 = vdwg.mxu0
    %1057 = vmatpush.bf16.msra.mxu0 %v745
    %1058 = vmatpush.bf16.msra.mxu0 %v737
    %1059 = vmatpush.bf16.msra.mxu0 %v729
    %1060 = vmatpush.bf16.msra.mxu0 %v721
    %1061 = vmatpush.bf16.msra.mxu0 %v713
    %1062 = vmatpush.bf16.msra.mxu0 %v705
    %1063 = vmatpush.bf16.msra.mxu0 %v697
    %1064 = vmatpush.bf16.msra.mxu0 %v689
    %1065 = vmatmul.bf16.gmra.mxu0 %v232
    %v1066 = vpop.f32.mrf.mxu0
    %v1067 = vadd.f32 %v1053, %v1066
    %v1068 = vpop.f32.mrf.mxu0
    %v1069 = vadd.f32 %v1055, %v1068
    %1070 = vdwg.mxu0
    %1071 = vmatpush.bf16.msra.mxu0 %v682
    %1072 = vmatpush.bf16.msra.mxu0 %v674
    %1073 = vmatpush.bf16.msra.mxu0 %v666
    %1074 = vmatpush.bf16.msra.mxu0 %v658
    %1075 = vmatpush.bf16.msra.mxu0 %v650
    %1076 = vmatpush.bf16.msra.mxu0 %v642
    %1077 = vmatpush.bf16.msra.mxu0 %v634
    %1078 = vmatpush.bf16.msra.mxu0 %v626
    %1079 = vmatmul.bf16.gmra.mxu0 %v231
    %v1080 = vpop.f32.mrf.mxu0
    %v1081 = vadd.f32 0.0, %v1080
    %v1082 = vpop.f32.mrf.mxu0
    %v1083 = vadd.f32 0.0, %v1082
    %1084 = vdwg.mxu0
    %1085 = vmatpush.bf16.msra.mxu0 %v746
    %1086 = vmatpush.bf16.msra.mxu0 %v738
    %1087 = vmatpush.bf16.msra.mxu0 %v730
    %1088 = vmatpush.bf16.msra.mxu0 %v722
    %1089 = vmatpush.bf16.msra.mxu0 %v714
    %1090 = vmatpush.bf16.msra.mxu0 %v706
    %1091 = vmatpush.bf16.msra.mxu0 %v698
    %1092 = vmatpush.bf16.msra.mxu0 %v690
    %1093 = vmatmul.bf16.gmra.mxu0 %v232
    %v1094 = vpop.f32.mrf.mxu0
    %v1095 = vadd.f32 %v1081, %v1094
    %v1096 = vpop.f32.mrf.mxu0
    %v1097 = vadd.f32 %v1083, %v1096
    %1098 = vdwg.mxu0
    %v1099 = vadd.f32 %v79, %v899
    %v1100 = vadd.f32 %v80, %v927
    %v1101 = vadd.f32 %v81, %v955
    %v1102 = vadd.f32 %v82, %v983
    %v1103 = vadd.f32 %v83, %v1011
    %v1104 = vadd.f32 %v84, %v1039
    %v1105 = vadd.f32 %v85, %v1067
    %v1106 = vadd.f32 %v86, %v1095
    %v1107 = vadd.f32 %v87, %v901
    %v1108 = vadd.f32 %v88, %v929
    %v1109 = vadd.f32 %v89, %v957
    %v1110 = vadd.f32 %v90, %v985
    %v1111 = vadd.f32 %v91, %v1013
    %v1112 = vadd.f32 %v92, %v1041
    %v1113 = vadd.f32 %v93, %v1069
    %v1114 = vadd.f32 %v94, %v1097
    %1115 = vst [vmem:[#allocation2] sm:$0xff] %v1099
    %1116 = vst [vmem:[#allocation2 + $0x8] sm:$0xff] %v1100
    %1117 = vst [vmem:[#allocation2 + $0x10] sm:$0xff] %v1101
    %1118 = vst [vmem:[#allocation2 + $0x18] sm:$0xff] %v1102
    %1119 = vst [vmem:[#allocation2 + $0x20] sm:$0xff] %v1103
    %1120 = vst [vmem:[#allocation2 + $0x28] sm:$0xff] %v1104
    %1121 = vst [vmem:[#allocation2 + $0x30] sm:$0xff] %v1105
    %1122 = vst [vmem:[#allocation2 + $0x38] sm:$0xff] %v1106
    %1123 = vst [vmem:[#allocation2 + $0x40] sm:$0xff] %v1107
    %1124 = vst [vmem:[#allocation2 + $0x48] sm:$0xff] %v1108
    %1125 = vst [vmem:[#allocation2 + $0x50] sm:$0xff] %v1109
    %1126 = vst [vmem:[#allocation2 + $0x58] sm:$0xff] %v1110
    %1127 = vst [vmem:[#allocation2 + $0x60] sm:$0xff] %v1111
    %1128 = vst [vmem:[#allocation2 + $0x68] sm:$0xff] %v1112
    %1129 = vst [vmem:[#allocation2 + $0x70] sm:$0xff] %v1113
    %1130 = vst [vmem:[#allocation2 + $0x78] sm:$0xff] %v1114
    // Predicated region
    $region42: #{contour_sample_refine_head.1} parent=1 // pred_check
      %p1131 = pneg %p59
    $region43: #{contour_sample_refine_head.1} parent=1 // pred_check_branch
      %1133 = sbr.rel (%p1131) target = $region45
    $region44: #{contour_sample_refine_head.1} parent=1 // pred_region
      %v1134 = vld [vmem:[#allocation2] sm:$0xff]
      %v1135 = vld [vmem:[#allocation2 + $0x8] sm:$0xff]
      %v1136 = vld [vmem:[#allocation2 + $0x10] sm:$0xff]
      %v1137 = vld [vmem:[#allocation2 + $0x18] sm:$0xff]
      %v1138 = vld [vmem:[#allocation2 + $0x20] sm:$0xff]
      %v1139 = vld [vmem:[#allocation2 + $0x28] sm:$0xff]
      %v1140 = vld [vmem:[#allocation2 + $0x30] sm:$0xff]
      %v1141 = vld [vmem:[#allocation2 + $0x38] sm:$0xff]
      %v1142 = vld [vmem:[#allocation2 + $0x40] sm:$0xff]
      %v1143 = vld [vmem:[#allocation2 + $0x48] sm:$0xff]
      %v1144 = vld [vmem:[#allocation2 + $0x50] sm:$0xff]
      %v1145 = vld [vmem:[#allocation2 + $0x58] sm:$0xff]
      %v1146 = vld [vmem:[#allocation2 + $0x60] sm:$0xff]
      %v1147 = vld [vmem:[#allocation2 + $0x68] sm:$0xff]
      %v1148 = vld [vmem:[#allocation2 + $0x70] sm:$0xff]
      %v1149 = vld [vmem:[#allocation2 + $0x78] sm:$0xff]
      %v1150 = vld [vmem:[%s2] sm:$0xff]
      %v1152 = vperm.slane %v1150, 0
      %v1153 = vperm.slane %v1150, 1
      %v1154 = vperm.slane %v1150, 2
      %v1155 = vperm.slane %v1150, 3
      %v1156 = vperm.slane %v1150, 4
      %v1157 = vperm.slane %v1150, 5
      %v1158 = vperm.slane %v1150, 6
      %v1159 = vperm.slane %v1150, 7
      %v1168 = vadd.f32 %v1134, %v1152
      %v1169 = vadd.f32 %v1135, %v1153
      %v1170 = vadd.f32 %v1136, %v1154
      %v1171 = vadd.f32 %v1137, %v1155
      %v1172 = vadd.f32 %v1138, %v1156
      %v1173 = vadd.f32 %v1139, %v1157
      %v1174 = vadd.f32 %v1140, %v1158
      %v1175 = vadd.f32 %v1141, %v1159
      %v1176 = vadd.f32 %v1142, %v1152
      %v1177 = vadd.f32 %v1143, %v1153
      %v1178 = vadd.f32 %v1144, %v1154
      %v1179 = vadd.f32 %v1145, %v1155
      %v1180 = vadd.f32 %v1146, %v1156
      %v1181 = vadd.f32 %v1147, %v1157
      %v1182 = vadd.f32 %v1148, %v1158
      %v1183 = vadd.f32 %v1149, %v1159
      %v1184 = vmax.f32 %v1168, 0.0
      %v1185 = vmax.f32 %v1169, 0.0
      %v1186 = vmax.f32 %v1170, 0.0
      %v1187 = vmax.f32 %v1171, 0.0
      %v1188 = vmax.f32 %v1172, 0.0
      %v1189 = vmax.f32 %v1173, 0.0
      %v1190 = vmax.f32 %v1174, 0.0
      %v1191 = vmax.f32 %v1175, 0.0
      %v1192 = vmax.f32 %v1176, 0.0
      %v1193 = vmax.f32 %v1177, 0.0
      %v1194 = vmax.f32 %v1178, 0.0
      %v1195 = vmax.f32 %v1179, 0.0
      %v1196 = vmax.f32 %v1180, 0.0
      %v1197 = vmax.f32 %v1181, 0.0
      %v1198 = vmax.f32 %v1182, 0.0
      %v1199 = vmax.f32 %v1183, 0.0
      %v1200 = vpack.c.bf16 %v1192, %v1184
      %v1201 = vpack.c.bf16 %v1193, %v1185
      %v1202 = vpack.c.bf16 %v1194, %v1186
      %v1203 = vpack.c.bf16 %v1195, %v1187
      %v1204 = vpack.c.bf16 %v1196, %v1188
      %v1205 = vpack.c.bf16 %v1197, %v1189
      %v1206 = vpack.c.bf16 %v1198, %v1190
      %v1207 = vpack.c.bf16 %v1199, %v1191
      %v1208 = vld [vmem:[#allocation6] sm:$0xff]
      %v1209 = vld [vmem:[#allocation6 + $0x8] sm:$0xff]
      %v1210 = vld [vmem:[#allocation6 + $0x10] sm:$0xff]
      %v1211 = vld [vmem:[#allocation6 + $0x18] sm:$0xff]
      %v1212 = vld [vmem:[#allocation6 + $0x20] sm:$0xff]
      %v1213 = vld [vmem:[#allocation6 + $0x28] sm:$0xff]
      %v1214 = vld [vmem:[#allocation6 + $0x30] sm:$0xff]
      %v1215 = vld [vmem:[#allocation6 + $0x38] sm:$0xff]
      %v1216 = vld [vmem:[#allocation6 + $0x40] sm:$0xff]
      %v1217 = vld [vmem:[#allocation6 + $0x48] sm:$0xff]
      %v1218 = vld [vmem:[#allocation6 + $0x50] sm:$0xff]
      %v1219 = vld [vmem:[#allocation6 + $0x58] sm:$0xff]
      %v1220 = vld [vmem:[#allocation6 + $0x60] sm:$0xff]
      %v1221 = vld [vmem:[#allocation6 + $0x68] sm:$0xff]
      %v1222 = vld [vmem:[#allocation6 + $0x70] sm:$0xff]
      %v1223 = vld [vmem:[#allocation6 + $0x78] sm:$0xff]
      %v1224 = vld [vmem:[#allocation6 + $0x80] sm:$0xff]
      %v1225 = vld [vmem:[#allocation6 + $0x88] sm:$0xff]
      %v1226 = vld [vmem:[#allocation6 + $0x90] sm:$0xff]
      %v1227 = vld [vmem:[#allocation6 + $0x98] sm:$0xff]
      %v1228 = vld [vmem:[#allocation6 + $0xa0] sm:$0xff]
      %v1229 = vld [vmem:[#allocation6 + $0xa8] sm:$0xff]
      %v1230 = vld [vmem:[#allocation6 + $0xb0] sm:$0xff]
      %v1231 = vld [vmem:[#allocation6 + $0xb8] sm:$0xff]
      %v1232 = vld [vmem:[#allocation6 + $0xc0] sm:$0xff]
      %v1233 = vld [vmem:[#allocation6 + $0xc8] sm:$0xff]
      %v1234 = vld [vmem:[#allocation6 + $0xd0] sm:$0xff]
      %v1235 = vld [vmem:[#allocation6 + $0xd8] sm:$0xff]
      %v1236 = vld [vmem:[#allocation6 + $0xe0] sm:$0xff]
      %v1237 = vld [vmem:[#allocation6 + $0xe8] sm:$0xff]
      %v1238 = vld [vmem:[#allocation6 + $0xf0] sm:$0xff]
      %v1239 = vld [vmem:[#allocation6 + $0xf8] sm:$0xff]
      %v1240 = vld [vmem:[#allocation6 + $0x100] sm:$0xff]
      %v1241 = vld [vmem:[#allocation6 + $0x108] sm:$0xff]
      %v1242 = vld [vmem:[#allocation6 + $0x110] sm:$0xff]
      %v1243 = vld [vmem:[#allocation6 + $0x118] sm:$0xff]
      %v1244 = vld [vmem:[#allocation6 + $0x120] sm:$0xff]
      %v1245 = vld [vmem:[#allocation6 + $0x128] sm:$0xff]
      %v1246 = vld [vmem:[#allocation6 + $0x130] sm:$0xff]
      %v1247 = vld [vmem:[#allocation6 + $0x138] sm:$0xff]
      %v1248 = vld [vmem:[#allocation6 + $0x140] sm:$0xff]
      %v1249 = vld [vmem:[#allocation6 + $0x148] sm:$0xff]
      %v1250 = vld [vmem:[#allocation6 + $0x150] sm:$0xff]
      %v1251 = vld [vmem:[#allocation6 + $0x158] sm:$0xff]
      %v1252 = vld [vmem:[#allocation6 + $0x160] sm:$0xff]
      %v1253 = vld [vmem:[#allocation6 + $0x168] sm:$0xff]
      %v1254 = vld [vmem:[#allocation6 + $0x170] sm:$0xff]
      %v1255 = vld [vmem:[#allocation6 + $0x178] sm:$0xff]
      %v1256 = vld [vmem:[#allocation6 + $0x180] sm:$0xff]
      %v1257 = vld [vmem:[#allocation6 + $0x188] sm:$0xff]
      %v1258 = vld [vmem:[#allocation6 + $0x190] sm:$0xff]
      %v1259 = vld [vmem:[#allocation6 + $0x198] sm:$0xff]
      %v1260 = vld [vmem:[#allocation6 + $0x1a0] sm:$0xff]
      %v1261 = vld [vmem:[#allocation6 + $0x1a8] sm:$0xff]
      %v1262 = vld [vmem:[#allocation6 + $0x1b0] sm:$0xff]
      %v1263 = vld [vmem:[#allocation6 + $0x1b8] sm:$0xff]
      %v1264 = vld [vmem:[#allocation6 + $0x1c0] sm:$0xff]
      %v1265 = vld [vmem:[#allocation6 + $0x1c8] sm:$0xff]
      %v1266 = vld [vmem:[#allocation6 + $0x1d0] sm:$0xff]
      %v1267 = vld [vmem:[#allocation6 + $0x1d8] sm:$0xff]
      %v1268 = vld [vmem:[#allocation6 + $0x1e0] sm:$0xff]
      %v1269 = vld [vmem:[#allocation6 + $0x1e8] sm:$0xff]
      %v1270 = vld [vmem:[#allocation6 + $0x1f0] sm:$0xff]
      %v1271 = vld [vmem:[#allocation6 + $0x1f8] sm:$0xff]
      %v1272 = vld [vmem:[#allocation6 + $0x200] sm:$0xff]
      %v1273 = vld [vmem:[#allocation6 + $0x208] sm:$0xff]
      %v1274 = vld [vmem:[#allocation6 + $0x210] sm:$0xff]
      %v1275 = vld [vmem:[#allocation6 + $0x218] sm:$0xff]
      %v1276 = vld [vmem:[#allocation6 + $0x220] sm:$0xff]
      %v1277 = vld [vmem:[#allocation6 + $0x228] sm:$0xff]
      %v1278 = vld [vmem:[#allocation6 + $0x230] sm:$0xff]
      %v1279 = vld [vmem:[#allocation6 + $0x238] sm:$0xff]
      %v1280 = vld [vmem:[#allocation6 + $0x240] sm:$0xff]
      %v1281 = vld [vmem:[#allocation6 + $0x248] sm:$0xff]
      %v1282 = vld [vmem:[#allocation6 + $0x250] sm:$0xff]
      %v1283 = vld [vmem:[#allocation6 + $0x258] sm:$0xff]
      %v1284 = vld [vmem:[#allocation6 + $0x260] sm:$0xff]
      %v1285 = vld [vmem:[#allocation6 + $0x268] sm:$0xff]
      %v1286 = vld [vmem:[#allocation6 + $0x270] sm:$0xff]
      %v1287 = vld [vmem:[#allocation6 + $0x278] sm:$0xff]
      %v1288 = vld [vmem:[#allocation6 + $0x280] sm:$0xff]
      %v1289 = vld [vmem:[#allocation6 + $0x288] sm:$0xff]
      %v1290 = vld [vmem:[#allocation6 + $0x290] sm:$0xff]
      %v1291 = vld [vmem:[#allocation6 + $0x298] sm:$0xff]
      %v1292 = vld [vmem:[#allocation6 + $0x2a0] sm:$0xff]
      %v1293 = vld [vmem:[#allocation6 + $0x2a8] sm:$0xff]
      %v1294 = vld [vmem:[#allocation6 + $0x2b0] sm:$0xff]
      %v1295 = vld [vmem:[#allocation6 + $0x2b8] sm:$0xff]
      %v1296 = vld [vmem:[#allocation6 + $0x2c0] sm:$0xff]
      %v1297 = vld [vmem:[#allocation6 + $0x2c8] sm:$0xff]
      %v1298 = vld [vmem:[#allocation6 + $0x2d0] sm:$0xff]
      %v1299 = vld [vmem:[#allocation6 + $0x2d8] sm:$0xff]
      %v1300 = vld [vmem:[#allocation6 + $0x2e0] sm:$0xff]
      %v1301 = vld [vmem:[#allocation6 + $0x2e8] sm:$0xff]
      %v1302 = vld [vmem:[#allocation6 + $0x2f0] sm:$0xff]
      %v1303 = vld [vmem:[#allocation6 + $0x2f8] sm:$0xff]
      %v1304 = vld [vmem:[#allocation6 + $0x300] sm:$0xff]
      %v1305 = vld [vmem:[#allocation6 + $0x308] sm:$0xff]
      %v1306 = vld [vmem:[#allocation6 + $0x310] sm:$0xff]
      %v1307 = vld [vmem:[#allocation6 + $0x318] sm:$0xff]
      %v1308 = vld [vmem:[#allocation6 + $0x320] sm:$0xff]
      %v1309 = vld [vmem:[#allocation6 + $0x328] sm:$0xff]
      %v1310 = vld [vmem:[#allocation6 + $0x330] sm:$0xff]
      %v1311 = vld [vmem:[#allocation6 + $0x338] sm:$0xff]
      %v1312 = vld [vmem:[#allocation6 + $0x340] sm:$0xff]
      %v1313 = vld [vmem:[#allocation6 + $0x348] sm:$0xff]
      %v1314 = vld [vmem:[#allocation6 + $0x350] sm:$0xff]
      %v1315 = vld [vmem:[#allocation6 + $0x358] sm:$0xff]
      %v1316 = vld [vmem:[#allocation6 + $0x360] sm:$0xff]
      %v1317 = vld [vmem:[#allocation6 + $0x368] sm:$0xff]
      %v1318 = vld [vmem:[#allocation6 + $0x370] sm:$0xff]
      %v1319 = vld [vmem:[#allocation6 + $0x378] sm:$0xff]
      %v1320 = vld [vmem:[#allocation6 + $0x380] sm:$0xff]
      %v1321 = vld [vmem:[#allocation6 + $0x388] sm:$0xff]
      %v1322 = vld [vmem:[#allocation6 + $0x390] sm:$0xff]
      %v1323 = vld [vmem:[#allocation6 + $0x398] sm:$0xff]
      %v1324 = vld [vmem:[#allocation6 + $0x3a0] sm:$0xff]
      %v1325 = vld [vmem:[#allocation6 + $0x3a8] sm:$0xff]
      %v1326 = vld [vmem:[#allocation6 + $0x3b0] sm:$0xff]
      %v1327 = vld [vmem:[#allocation6 + $0x3b8] sm:$0xff]
      %v1328 = vld [vmem:[#allocation6 + $0x3c0] sm:$0xff]
      %v1329 = vld [vmem:[#allocation6 + $0x3c8] sm:$0xff]
      %v1330 = vld [vmem:[#allocation6 + $0x3d0] sm:$0xff]
      %v1331 = vld [vmem:[#allocation6 + $0x3d8] sm:$0xff]
      %v1332 = vld [vmem:[#allocation6 + $0x3e0] sm:$0xff]
      %v1333 = vld [vmem:[#allocation6 + $0x3e8] sm:$0xff]
      %v1334 = vld [vmem:[#allocation6 + $0x3f0] sm:$0xff]
      %v1335 = vld [vmem:[#allocation6 + $0x3f8] sm:$0xff]
      %v1336 = vld [vmem:[#allocation6 + $0x400] sm:$0xff]
      %v1337 = vld [vmem:[#allocation6 + $0x408] sm:$0xff]
      %v1338 = vld [vmem:[#allocation6 + $0x410] sm:$0xff]
      %v1339 = vld [vmem:[#allocation6 + $0x418] sm:$0xff]
      %v1340 = vld [vmem:[#allocation6 + $0x420] sm:$0xff]
      %v1341 = vld [vmem:[#allocation6 + $0x428] sm:$0xff]
      %v1342 = vld [vmem:[#allocation6 + $0x430] sm:$0xff]
      %v1343 = vld [vmem:[#allocation6 + $0x438] sm:$0xff]
      %v1344 = vld [vmem:[#allocation6 + $0x440] sm:$0xff]
      %v1345 = vld [vmem:[#allocation6 + $0x448] sm:$0xff]
      %v1346 = vld [vmem:[#allocation6 + $0x450] sm:$0xff]
      %v1347 = vld [vmem:[#allocation6 + $0x458] sm:$0xff]
      %v1348 = vld [vmem:[#allocation6 + $0x460] sm:$0xff]
      %v1349 = vld [vmem:[#allocation6 + $0x468] sm:$0xff]
      %v1350 = vld [vmem:[#allocation6 + $0x470] sm:$0xff]
      %v1351 = vld [vmem:[#allocation6 + $0x478] sm:$0xff]
      %v1352 = vld [vmem:[#allocation6 + $0x480] sm:$0xff]
      %v1353 = vld [vmem:[#allocation6 + $0x488] sm:$0xff]
      %v1354 = vld [vmem:[#allocation6 + $0x490] sm:$0xff]
      %v1355 = vld [vmem:[#allocation6 + $0x498] sm:$0xff]
      %v1356 = vld [vmem:[#allocation6 + $0x4a0] sm:$0xff]
      %v1357 = vld [vmem:[#allocation6 + $0x4a8] sm:$0xff]
      %v1358 = vld [vmem:[#allocation6 + $0x4b0] sm:$0xff]
      %v1359 = vld [vmem:[#allocation6 + $0x4b8] sm:$0xff]
      %v1360 = vld [vmem:[#allocation6 + $0x4c0] sm:$0xff]
      %v1361 = vld [vmem:[#allocation6 + $0x4c8] sm:$0xff]
      %v1362 = vld [vmem:[#allocation6 + $0x4d0] sm:$0xff]
      %v1363 = vld [vmem:[#allocation6 + $0x4d8] sm:$0xff]
      %v1364 = vld [vmem:[#allocation6 + $0x4e0] sm:$0xff]
      %v1365 = vld [vmem:[#allocation6 + $0x4e8] sm:$0xff]
      %v1366 = vld [vmem:[#allocation6 + $0x4f0] sm:$0xff]
      %v1367 = vld [vmem:[#allocation6 + $0x4f8] sm:$0xff]
      %v1368 = vld [vmem:[#allocation6 + $0x500] sm:$0xff]
      %v1369 = vld [vmem:[#allocation6 + $0x508] sm:$0xff]
      %v1370 = vld [vmem:[#allocation6 + $0x510] sm:$0xff]
      %v1371 = vld [vmem:[#allocation6 + $0x518] sm:$0xff]
      %v1372 = vld [vmem:[#allocation6 + $0x520] sm:$0xff]
      %v1373 = vld [vmem:[#allocation6 + $0x528] sm:$0xff]
      %v1374 = vld [vmem:[#allocation6 + $0x530] sm:$0xff]
      %v1375 = vld [vmem:[#allocation6 + $0x538] sm:$0xff]
      %v1376 = vld [vmem:[#allocation6 + $0x540] sm:$0xff]
      %v1377 = vld [vmem:[#allocation6 + $0x548] sm:$0xff]
      %v1378 = vld [vmem:[#allocation6 + $0x550] sm:$0xff]
      %v1379 = vld [vmem:[#allocation6 + $0x558] sm:$0xff]
      %v1380 = vld [vmem:[#allocation6 + $0x560] sm:$0xff]
      %v1381 = vld [vmem:[#allocation6 + $0x568] sm:$0xff]
      %v1382 = vld [vmem:[#allocation6 + $0x570] sm:$0xff]
      %v1383 = vld [vmem:[#allocation6 + $0x578] sm:$0xff]
      %v1384 = vld [vmem:[#allocation6 + $0x580] sm:$0xff]
      %v1385 = vld [vmem:[#allocation6 + $0x588] sm:$0xff]
      %v1386 = vld [vmem:[#allocation6 + $0x590] sm:$0xff]
      %v1387 = vld [vmem:[#allocation6 + $0x598] sm:$0xff]
      %v1388 = vld [vmem:[#allocation6 + $0x5a0] sm:$0xff]
      %v1389 = vld [vmem:[#allocation6 + $0x5a8] sm:$0xff]
      %v1390 = vld [vmem:[#allocation6 + $0x5b0] sm:$0xff]
      %v1391 = vld [vmem:[#allocation6 + $0x5b8] sm:$0xff]
      %v1392 = vld [vmem:[#allocation6 + $0x5c0] sm:$0xff]
      %v1393 = vld [vmem:[#allocation6 + $0x5c8] sm:$0xff]
      %v1394 = vld [vmem:[#allocation6 + $0x5d0] sm:$0xff]
      %v1395 = vld [vmem:[#allocation6 + $0x5d8] sm:$0xff]
      %v1396 = vld [vmem:[#allocation6 + $0x5e0] sm:$0xff]
      %v1397 = vld [vmem:[#allocation6 + $0x5e8] sm:$0xff]
      %v1398 = vld [vmem:[#allocation6 + $0x5f0] sm:$0xff]
      %v1399 = vld [vmem:[#allocation6 + $0x5f8] sm:$0xff]
      %v1400 = vld [vmem:[#allocation6 + $0x600] sm:$0xff]
      %v1401 = vld [vmem:[#allocation6 + $0x608] sm:$0xff]
      %v1402 = vld [vmem:[#allocation6 + $0x610] sm:$0xff]
      %v1403 = vld [vmem:[#allocation6 + $0x618] sm:$0xff]
      %v1404 = vld [vmem:[#allocation6 + $0x620] sm:$0xff]
      %v1405 = vld [vmem:[#allocation6 + $0x628] sm:$0xff]
      %v1406 = vld [vmem:[#allocation6 + $0x630] sm:$0xff]
      %v1407 = vld [vmem:[#allocation6 + $0x638] sm:$0xff]
      %v1408 = vld [vmem:[#allocation6 + $0x640] sm:$0xff]
      %v1409 = vld [vmem:[#allocation6 + $0x648] sm:$0xff]
      %v1410 = vld [vmem:[#allocation6 + $0x650] sm:$0xff]
      %v1411 = vld [vmem:[#allocation6 + $0x658] sm:$0xff]
      %v1412 = vld [vmem:[#allocation6 + $0x660] sm:$0xff]
      %v1413 = vld [vmem:[#allocation6 + $0x668] sm:$0xff]
      %v1414 = vld [vmem:[#allocation6 + $0x670] sm:$0xff]
      %v1415 = vld [vmem:[#allocation6 + $0x678] sm:$0xff]
      %v1416 = vld [vmem:[#allocation6 + $0x680] sm:$0xff]
      %v1417 = vld [vmem:[#allocation6 + $0x688] sm:$0xff]
      %v1418 = vld [vmem:[#allocation6 + $0x690] sm:$0xff]
      %v1419 = vld [vmem:[#allocation6 + $0x698] sm:$0xff]
      %v1420 = vld [vmem:[#allocation6 + $0x6a0] sm:$0xff]
      %v1421 = vld [vmem:[#allocation6 + $0x6a8] sm:$0xff]
      %v1422 = vld [vmem:[#allocation6 + $0x6b0] sm:$0xff]
      %v1423 = vld [vmem:[#allocation6 + $0x6b8] sm:$0xff]
      %v1424 = vld [vmem:[#allocation6 + $0x6c0] sm:$0xff]
      %v1425 = vld [vmem:[#allocation6 + $0x6c8] sm:$0xff]
      %v1426 = vld [vmem:[#allocation6 + $0x6d0] sm:$0xff]
      %v1427 = vld [vmem:[#allocation6 + $0x6d8] sm:$0xff]
      %v1428 = vld [vmem:[#allocation6 + $0x6e0] sm:$0xff]
      %v1429 = vld [vmem:[#allocation6 + $0x6e8] sm:$0xff]
      %v1430 = vld [vmem:[#allocation6 + $0x6f0] sm:$0xff]
      %v1431 = vld [vmem:[#allocation6 + $0x6f8] sm:$0xff]
      %v1432 = vld [vmem:[#allocation6 + $0x700] sm:$0xff]
      %v1433 = vld [vmem:[#allocation6 + $0x708] sm:$0xff]
      %v1434 = vld [vmem:[#allocation6 + $0x710] sm:$0xff]
      %v1435 = vld [vmem:[#allocation6 + $0x718] sm:$0xff]
      %v1436 = vld [vmem:[#allocation6 + $0x720] sm:$0xff]
      %v1437 = vld [vmem:[#allocation6 + $0x728] sm:$0xff]
      %v1438 = vld [vmem:[#allocation6 + $0x730] sm:$0xff]
      %v1439 = vld [vmem:[#allocation6 + $0x738] sm:$0xff]
      %v1440 = vld [vmem:[#allocation6 + $0x740] sm:$0xff]
      %v1441 = vld [vmem:[#allocation6 + $0x748] sm:$0xff]
      %v1442 = vld [vmem:[#allocation6 + $0x750] sm:$0xff]
      %v1443 = vld [vmem:[#allocation6 + $0x758] sm:$0xff]
      %v1444 = vld [vmem:[#allocation6 + $0x760] sm:$0xff]
      %v1445 = vld [vmem:[#allocation6 + $0x768] sm:$0xff]
      %v1446 = vld [vmem:[#allocation6 + $0x770] sm:$0xff]
      %v1447 = vld [vmem:[#allocation6 + $0x778] sm:$0xff]
      %v1448 = vld [vmem:[#allocation6 + $0x780] sm:$0xff]
      %v1449 = vld [vmem:[#allocation6 + $0x788] sm:$0xff]
      %v1450 = vld [vmem:[#allocation6 + $0x790] sm:$0xff]
      %v1451 = vld [vmem:[#allocation6 + $0x798] sm:$0xff]
      %v1452 = vld [vmem:[#allocation6 + $0x7a0] sm:$0xff]
      %v1453 = vld [vmem:[#allocation6 + $0x7a8] sm:$0xff]
      %v1454 = vld [vmem:[#allocation6 + $0x7b0] sm:$0xff]
      %v1455 = vld [vmem:[#allocation6 + $0x7b8] sm:$0xff]
      %v1456 = vld [vmem:[#allocation6 + $0x7c0] sm:$0xff]
      %v1457 = vld [vmem:[#allocation6 + $0x7c8] sm:$0xff]
      %v1458 = vld [vmem:[#allocation6 + $0x7d0] sm:$0xff]
      %v1459 = vld [vmem:[#allocation6 + $0x7d8] sm:$0xff]
      %v1460 = vld [vmem:[#allocation6 + $0x7e0] sm:$0xff]
      %v1461 = vld [vmem:[#allocation6 + $0x7e8] sm:$0xff]
      %v1462 = vld [vmem:[#allocation6 + $0x7f0] sm:$0xff]
      %v1463 = vld [vmem:[#allocation6 + $0x7f8] sm:$0xff]
      %v1464 = vld [vmem:[%s4] sm:$0xf]
      %v1466 = vperm.slane %v1464, 0
      %v1467 = vperm.slane %v1464, 1
      %v1468 = vperm.slane %v1464, 2
      %v1469 = vperm.slane %v1464, 3
      %v1730 = vunpack.c.l.b16 %v1208
      %v1731 = vunpack.c.h.b16 %v1208
      %v1732 = vunpack.c.l.b16 %v1209
      %v1733 = vunpack.c.h.b16 %v1209
      %v1734 = vunpack.c.l.b16 %v1210
      %v1735 = vunpack.c.h.b16 %v1210
      %v1736 = vunpack.c.l.b16 %v1211
      %v1737 = vunpack.c.h.b16 %v1211
      %v1738 = vunpack.c.l.b16 %v1212
      %v1739 = vunpack.c.h.b16 %v1212
      %v1740 = vunpack.c.l.b16 %v1213
      %v1741 = vunpack.c.h.b16 %v1213
      %v1742 = vunpack.c.l.b16 %v1214
      %v1743 = vunpack.c.h.b16 %v1214
      %v1744 = vunpack.c.l.b16 %v1215
      %v1745 = vunpack.c.h.b16 %v1215
      %v1746 = vunpack.c.l.b16 %v1216
      %v1747 = vunpack.c.h.b16 %v1216
      %v1748 = vunpack.c.l.b16 %v1217
      %v1749 = vunpack.c.h.b16 %v1217
      %v1750 = vunpack.c.l.b16 %v1218
      %v1751 = vunpack.c.h.b16 %v1218
      %v1752 = vunpack.c.l.b16 %v1219
      %v1753 = vunpack.c.h.b16 %v1219
      %v1754 = vunpack.c.l.b16 %v1220
      %v1755 = vunpack.c.h.b16 %v1220
      %v1756 = vunpack.c.l.b16 %v1221
      %v1757 = vunpack.c.h.b16 %v1221
      %v1758 = vunpack.c.l.b16 %v1222
      %v1759 = vunpack.c.h.b16 %v1222
      %v1760 = vunpack.c.l.b16 %v1223
      %v1761 = vunpack.c.h.b16 %v1223
      %v1762 = vunpack.c.l.b16 %v1224
      %v1763 = vunpack.c.h.b16 %v1224
      %v1764 = vunpack.c.l.b16 %v1225
      %v1765 = vunpack.c.h.b16 %v1225
      %v1766 = vunpack.c.l.b16 %v1226
      %v1767 = vunpack.c.h.b16 %v1226
      %v1768 = vunpack.c.l.b16 %v1227
      %v1769 = vunpack.c.h.b16 %v1227
      %v1770 = vunpack.c.l.b16 %v1228
      %v1771 = vunpack.c.h.b16 %v1228
      %v1772 = vunpack.c.l.b16 %v1229
      %v1773 = vunpack.c.h.b16 %v1229
      %v1774 = vunpack.c.l.b16 %v1230
      %v1775 = vunpack.c.h.b16 %v1230
      %v1776 = vunpack.c.l.b16 %v1231
      %v1777 = vunpack.c.h.b16 %v1231
      %v1778 = vunpack.c.l.b16 %v1232
      %v1779 = vunpack.c.h.b16 %v1232
      %v1780 = vunpack.c.l.b16 %v1233
      %v1781 = vunpack.c.h.b16 %v1233
      %v1782 = vunpack.c.l.b16 %v1234
      %v1783 = vunpack.c.h.b16 %v1234
      %v1784 = vunpack.c.l.b16 %v1235
      %v1785 = vunpack.c.h.b16 %v1235
      %v1786 = vunpack.c.l.b16 %v1236
      %v1787 = vunpack.c.h.b16 %v1236
      %v1788 = vunpack.c.l.b16 %v1237
      %v1789 = vunpack.c.h.b16 %v1237
      %v1790 = vunpack.c.l.b16 %v1238
      %v1791 = vunpack.c.h.b16 %v1238
      %v1792 = vunpack.c.l.b16 %v1239
      %v1793 = vunpack.c.h.b16 %v1239
      %v1794 = vunpack.c.l.b16 %v1240
      %v1795 = vunpack.c.h.b16 %v1240
      %v1796 = vunpack.c.l.b16 %v1241
      %v1797 = vunpack.c.h.b16 %v1241
      %v1798 = vunpack.c.l.b16 %v1242
      %v1799 = vunpack.c.h.b16 %v1242
      %v1800 = vunpack.c.l.b16 %v1243
      %v1801 = vunpack.c.h.b16 %v1243
      %v1802 = vunpack.c.l.b16 %v1244
      %v1803 = vunpack.c.h.b16 %v1244
      %v1804 = vunpack.c.l.b16 %v1245
      %v1805 = vunpack.c.h.b16 %v1245
      %v1806 = vunpack.c.l.b16 %v1246
      %v1807 = vunpack.c.h.b16 %v1246
      %v1808 = vunpack.c.l.b16 %v1247
      %v1809 = vunpack.c.h.b16 %v1247
      %v1810 = vunpack.c.l.b16 %v1248
      %v1811 = vunpack.c.h.b16 %v1248
      %v1812 = vunpack.c.l.b16 %v1249
      %v1813 = vunpack.c.h.b16 %v1249
      %v1814 = vunpack.c.l.b16 %v1250
      %v1815 = vunpack.c.h.b16 %v1250
      %v1816 = vunpack.c.l.b16 %v1251
      %v1817 = vunpack.c.h.b16 %v1251
      %v1818 = vunpack.c.l.b16 %v1252
      %v1819 = vunpack.c.h.b16 %v1252
      %v1820 = vunpack.c.l.b16 %v1253
      %v1821 = vunpack.c.h.b16 %v1253
      %v1822 = vunpack.c.l.b16 %v1254
      %v1823 = vunpack.c.h.b16 %v1254
      %v1824 = vunpack.c.l.b16 %v1255
      %v1825 = vunpack.c.h.b16 %v1255
      %v1826 = vunpack.c.l.b16 %v1256
      %v1827 = vunpack.c.h.b16 %v1256
      %v1828 = vunpack.c.l.b16 %v1257
      %v1829 = vunpack.c.h.b16 %v1257
      %v1830 = vunpack.c.l.b16 %v1258
      %v1831 = vunpack.c.h.b16 %v1258
      %v1832 = vunpack.c.l.b16 %v1259
      %v1833 = vunpack.c.h.b16 %v1259
      %v1834 = vunpack.c.l.b16 %v1260
      %v1835 = vunpack.c.h.b16 %v1260
      %v1836 = vunpack.c.l.b16 %v1261
      %v1837 = vunpack.c.h.b16 %v1261
      %v1838 = vunpack.c.l.b16 %v1262
      %v1839 = vunpack.c.h.b16 %v1262
      %v1840 = vunpack.c.l.b16 %v1263
      %v1841 = vunpack.c.h.b16 %v1263
      %v1842 = vunpack.c.l.b16 %v1264
      %v1843 = vunpack.c.h.b16 %v1264
      %v1844 = vunpack.c.l.b16 %v1265
      %v1845 = vunpack.c.h.b16 %v1265
      %v1846 = vunpack.c.l.b16 %v1266
      %v1847 = vunpack.c.h.b16 %v1266
      %v1848 = vunpack.c.l.b16 %v1267
      %v1849 = vunpack.c.h.b16 %v1267
      %v1850 = vunpack.c.l.b16 %v1268
      %v1851 = vunpack.c.h.b16 %v1268
      %v1852 = vunpack.c.l.b16 %v1269
      %v1853 = vunpack.c.h.b16 %v1269
      %v1854 = vunpack.c.l.b16 %v1270
      %v1855 = vunpack.c.h.b16 %v1270
      %v1856 = vunpack.c.l.b16 %v1271
      %v1857 = vunpack.c.h.b16 %v1271
      %v1858 = vunpack.c.l.b16 %v1272
      %v1859 = vunpack.c.h.b16 %v1272
      %v1860 = vunpack.c.l.b16 %v1273
      %v1861 = vunpack.c.h.b16 %v1273
      %v1862 = vunpack.c.l.b16 %v1274
      %v1863 = vunpack.c.h.b16 %v1274
      %v1864 = vunpack.c.l.b16 %v1275
      %v1865 = vunpack.c.h.b16 %v1275
      %v1866 = vunpack.c.l.b16 %v1276
      %v1867 = vunpack.c.h.b16 %v1276
      %v1868 = vunpack.c.l.b16 %v1277
      %v1869 = vunpack.c.h.b16 %v1277
      %v1870 = vunpack.c.l.b16 %v1278
      %v1871 = vunpack.c.h.b16 %v1278
      %v1872 = vunpack.c.l.b16 %v1279
      %v1873 = vunpack.c.h.b16 %v1279
      %v1874 = vunpack.c.l.b16 %v1280
      %v1875 = vunpack.c.h.b16 %v1280
      %v1876 = vunpack.c.l.b16 %v1281
      %v1877 = vunpack.c.h.b16 %v1281
      %v1878 = vunpack.c.l.b16 %v1282
      %v1879 = vunpack.c.h.b16 %v1282
      %v1880 = vunpack.c.l.b16 %v1283
      %v1881 = vunpack.c.h.b16 %v1283
      %v1882 = vunpack.c.l.b16 %v1284
      %v1883 = vunpack.c.h.b16 %v1284
      %v1884 = vunpack.c.l.b16 %v1285
      %v1885 = vunpack.c.h.b16 %v1285
      %v1886 = vunpack.c.l.b16 %v1286
      %v1887 = vunpack.c.h.b16 %v1286
      %v1888 = vunpack.c.l.b16 %v1287
      %v1889 = vunpack.c.h.b16 %v1287
      %v1890 = vunpack.c.l.b16 %v1288
      %v1891 = vunpack.c.h.b16 %v1288
      %v1892 = vunpack.c.l.b16 %v1289
      %v1893 = vunpack.c.h.b16 %v1289
      %v1894 = vunpack.c.l.b16 %v1290
      %v1895 = vunpack.c.h.b16 %v1290
      %v1896 = vunpack.c.l.b16 %v1291
      %v1897 = vunpack.c.h.b16 %v1291
      %v1898 = vunpack.c.l.b16 %v1292
      %v1899 = vunpack.c.h.b16 %v1292
      %v1900 = vunpack.c.l.b16 %v1293
      %v1901 = vunpack.c.h.b16 %v1293
      %v1902 = vunpack.c.l.b16 %v1294
      %v1903 = vunpack.c.h.b16 %v1294
      %v1904 = vunpack.c.l.b16 %v1295
      %v1905 = vunpack.c.h.b16 %v1295
      %v1906 = vunpack.c.l.b16 %v1296
      %v1907 = vunpack.c.h.b16 %v1296
      %v1908 = vunpack.c.l.b16 %v1297
      %v1909 = vunpack.c.h.b16 %v1297
      %v1910 = vunpack.c.l.b16 %v1298
      %v1911 = vunpack.c.h.b16 %v1298
      %v1912 = vunpack.c.l.b16 %v1299
      %v1913 = vunpack.c.h.b16 %v1299
      %v1914 = vunpack.c.l.b16 %v1300
      %v1915 = vunpack.c.h.b16 %v1300
      %v1916 = vunpack.c.l.b16 %v1301
      %v1917 = vunpack.c.h.b16 %v1301
      %v1918 = vunpack.c.l.b16 %v1302
      %v1919 = vunpack.c.h.b16 %v1302
      %v1920 = vunpack.c.l.b16 %v1303
      %v1921 = vunpack.c.h.b16 %v1303
      %v1922 = vunpack.c.l.b16 %v1304
      %v1923 = vunpack.c.h.b16 %v1304
      %v1924 = vunpack.c.l.b16 %v1305
      %v1925 = vunpack.c.h.b16 %v1305
      %v1926 = vunpack.c.l.b16 %v1306
      %v1927 = vunpack.c.h.b16 %v1306
      %v1928 = vunpack.c.l.b16 %v1307
      %v1929 = vunpack.c.h.b16 %v1307
      %v1930 = vunpack.c.l.b16 %v1308
      %v1931 = vunpack.c.h.b16 %v1308
      %v1932 = vunpack.c.l.b16 %v1309
      %v1933 = vunpack.c.h.b16 %v1309
      %v1934 = vunpack.c.l.b16 %v1310
      %v1935 = vunpack.c.h.b16 %v1310
      %v1936 = vunpack.c.l.b16 %v1311
      %v1937 = vunpack.c.h.b16 %v1311
      %v1938 = vunpack.c.l.b16 %v1312
      %v1939 = vunpack.c.h.b16 %v1312
      %v1940 = vunpack.c.l.b16 %v1313
      %v1941 = vunpack.c.h.b16 %v1313
      %v1942 = vunpack.c.l.b16 %v1314
      %v1943 = vunpack.c.h.b16 %v1314
      %v1944 = vunpack.c.l.b16 %v1315
      %v1945 = vunpack.c.h.b16 %v1315
      %v1946 = vunpack.c.l.b16 %v1316
      %v1947 = vunpack.c.h.b16 %v1316
      %v1948 = vunpack.c.l.b16 %v1317
      %v1949 = vunpack.c.h.b16 %v1317
      %v1950 = vunpack.c.l.b16 %v1318
      %v1951 = vunpack.c.h.b16 %v1318
      %v1952 = vunpack.c.l.b16 %v1319
      %v1953 = vunpack.c.h.b16 %v1319
      %v1954 = vunpack.c.l.b16 %v1320
      %v1955 = vunpack.c.h.b16 %v1320
      %v1956 = vunpack.c.l.b16 %v1321
      %v1957 = vunpack.c.h.b16 %v1321
      %v1958 = vunpack.c.l.b16 %v1322
      %v1959 = vunpack.c.h.b16 %v1322
      %v1960 = vunpack.c.l.b16 %v1323
      %v1961 = vunpack.c.h.b16 %v1323
      %v1962 = vunpack.c.l.b16 %v1324
      %v1963 = vunpack.c.h.b16 %v1324
      %v1964 = vunpack.c.l.b16 %v1325
      %v1965 = vunpack.c.h.b16 %v1325
      %v1966 = vunpack.c.l.b16 %v1326
      %v1967 = vunpack.c.h.b16 %v1326
      %v1968 = vunpack.c.l.b16 %v1327
      %v1969 = vunpack.c.h.b16 %v1327
      %v1970 = vunpack.c.l.b16 %v1328
      %v1971 = vunpack.c.h.b16 %v1328
      %v1972 = vunpack.c.l.b16 %v1329
      %v1973 = vunpack.c.h.b16 %v1329
      %v1974 = vunpack.c.l.b16 %v1330
      %v1975 = vunpack.c.h.b16 %v1330
      %v1976 = vunpack.c.l.b16 %v1331
      %v1977 = vunpack.c.h.b16 %v1331
      %v1978 = vunpack.c.l.b16 %v1332
      %v1979 = vunpack.c.h.b16 %v1332
      %v1980 = vunpack.c.l.b16 %v1333
      %v1981 = vunpack.c.h.b16 %v1333
      %v1982 = vunpack.c.l.b16 %v1334
      %v1983 = vunpack.c.h.b16 %v1334
      %v1984 = vunpack.c.l.b16 %v1335
      %v1985 = vunpack.c.h.b16 %v1335
      %v1986 = vunpack.c.l.b16 %v1336
      %v1987 = vunpack.c.h.b16 %v1336
      %v1988 = vunpack.c.l.b16 %v1337
      %v1989 = vunpack.c.h.b16 %v1337
      %v1990 = vunpack.c.l.b16 %v1338
      %v1991 = vunpack.c.h.b16 %v1338
      %v1992 = vunpack.c.l.b16 %v1339
      %v1993 = vunpack.c.h.b16 %v1339
      %v1994 = vunpack.c.l.b16 %v1340
      %v1995 = vunpack.c.h.b16 %v1340
      %v1996 = vunpack.c.l.b16 %v1341
      %v1997 = vunpack.c.h.b16 %v1341
      %v1998 = vunpack.c.l.b16 %v1342
      %v1999 = vunpack.c.h.b16 %v1342
      %v2000 = vunpack.c.l.b16 %v1343
      %v2001 = vunpack.c.h.b16 %v1343
      %v2002 = vunpack.c.l.b16 %v1344
      %v2003 = vunpack.c.h.b16 %v1344
      %v2004 = vunpack.c.l.b16 %v1345
      %v2005 = vunpack.c.h.b16 %v1345
      %v2006 = vunpack.c.l.b16 %v1346
      %v2007 = vunpack.c.h.b16 %v1346
      %v2008 = vunpack.c.l.b16 %v1347
      %v2009 = vunpack.c.h.b16 %v1347
      %v2010 = vunpack.c.l.b16 %v1348
      %v2011 = vunpack.c.h.b16 %v1348
      %v2012 = vunpack.c.l.b16 %v1349
      %v2013 = vunpack.c.h.b16 %v1349
      %v2014 = vunpack.c.l.b16 %v1350
      %v2015 = vunpack.c.h.b16 %v1350
      %v2016 = vunpack.c.l.b16 %v1351
      %v2017 = vunpack.c.h.b16 %v1351
      %v2018 = vunpack.c.l.b16 %v1352
      %v2019 = vunpack.c.h.b16 %v1352
      %v2020 = vunpack.c.l.b16 %v1353
      %v2021 = vunpack.c.h.b16 %v1353
      %v2022 = vunpack.c.l.b16 %v1354
      %v2023 = vunpack.c.h.b16 %v1354
      %v2024 = vunpack.c.l.b16 %v1355
      %v2025 = vunpack.c.h.b16 %v1355
      %v2026 = vunpack.c.l.b16 %v1356
      %v2027 = vunpack.c.h.b16 %v1356
      %v2028 = vunpack.c.l.b16 %v1357
      %v2029 = vunpack.c.h.b16 %v1357
      %v2030 = vunpack.c.l.b16 %v1358
      %v2031 = vunpack.c.h.b16 %v1358
      %v2032 = vunpack.c.l.b16 %v1359
      %v2033 = vunpack.c.h.b16 %v1359
      %v2034 = vunpack.c.l.b16 %v1360
      %v2035 = vunpack.c.h.b16 %v1360
      %v2036 = vunpack.c.l.b16 %v1361
      %v2037 = vunpack.c.h.b16 %v1361
      %v2038 = vunpack.c.l.b16 %v1362
      %v2039 = vunpack.c.h.b16 %v1362
      %v2040 = vunpack.c.l.b16 %v1363
      %v2041 = vunpack.c.h.b16 %v1363
      %v2042 = vunpack.c.l.b16 %v1364
      %v2043 = vunpack.c.h.b16 %v1364
      %v2044 = vunpack.c.l.b16 %v1365
      %v2045 = vunpack.c.h.b16 %v1365
      %v2046 = vunpack.c.l.b16 %v1366
      %v2047 = vunpack.c.h.b16 %v1366
      %v2048 = vunpack.c.l.b16 %v1367
      %v2049 = vunpack.c.h.b16 %v1367
      %v2050 = vunpack.c.l.b16 %v1368
      %v2051 = vunpack.c.h.b16 %v1368
      %v2052 = vunpack.c.l.b16 %v1369
      %v2053 = vunpack.c.h.b16 %v1369
      %v2054 = vunpack.c.l.b16 %v1370
      %v2055 = vunpack.c.h.b16 %v1370
      %v2056 = vunpack.c.l.b16 %v1371
      %v2057 = vunpack.c.h.b16 %v1371
      %v2058 = vunpack.c.l.b16 %v1372
      %v2059 = vunpack.c.h.b16 %v1372
      %v2060 = vunpack.c.l.b16 %v1373
      %v2061 = vunpack.c.h.b16 %v1373
      %v2062 = vunpack.c.l.b16 %v1374
      %v2063 = vunpack.c.h.b16 %v1374
      %v2064 = vunpack.c.l.b16 %v1375
      %v2065 = vunpack.c.h.b16 %v1375
      %v2066 = vunpack.c.l.b16 %v1376
      %v2067 = vunpack.c.h.b16 %v1376
      %v2068 = vunpack.c.l.b16 %v1377
      %v2069 = vunpack.c.h.b16 %v1377
      %v2070 = vunpack.c.l.b16 %v1378
      %v2071 = vunpack.c.h.b16 %v1378
      %v2072 = vunpack.c.l.b16 %v1379
      %v2073 = vunpack.c.h.b16 %v1379
      %v2074 = vunpack.c.l.b16 %v1380
      %v2075 = vunpack.c.h.b16 %v1380
      %v2076 = vunpack.c.l.b16 %v1381
      %v2077 = vunpack.c.h.b16 %v1381
      %v2078 = vunpack.c.l.b16 %v1382
      %v2079 = vunpack.c.h.b16 %v1382
      %v2080 = vunpack.c.l.b16 %v1383
      %v2081 = vunpack.c.h.b16 %v1383
      %v2082 = vunpack.c.l.b16 %v1384
      %v2083 = vunpack.c.h.b16 %v1384
      %v2084 = vunpack.c.l.b16 %v1385
      %v2085 = vunpack.c.h.b16 %v1385
      %v2086 = vunpack.c.l.b16 %v1386
      %v2087 = vunpack.c.h.b16 %v1386
      %v2088 = vunpack.c.l.b16 %v1387
      %v2089 = vunpack.c.h.b16 %v1387
      %v2090 = vunpack.c.l.b16 %v1388
      %v2091 = vunpack.c.h.b16 %v1388
      %v2092 = vunpack.c.l.b16 %v1389
      %v2093 = vunpack.c.h.b16 %v1389
      %v2094 = vunpack.c.l.b16 %v1390
      %v2095 = vunpack.c.h.b16 %v1390
      %v2096 = vunpack.c.l.b16 %v1391
      %v2097 = vunpack.c.h.b16 %v1391
      %v2098 = vunpack.c.l.b16 %v1392
      %v2099 = vunpack.c.h.b16 %v1392
      %v2100 = vunpack.c.l.b16 %v1393
      %v2101 = vunpack.c.h.b16 %v1393
      %v2102 = vunpack.c.l.b16 %v1394
      %v2103 = vunpack.c.h.b16 %v1394
      %v2104 = vunpack.c.l.b16 %v1395
      %v2105 = vunpack.c.h.b16 %v1395
      %v2106 = vunpack.c.l.b16 %v1396
      %v2107 = vunpack.c.h.b16 %v1396
      %v2108 = vunpack.c.l.b16 %v1397
      %v2109 = vunpack.c.h.b16 %v1397
      %v2110 = vunpack.c.l.b16 %v1398
      %v2111 = vunpack.c.h.b16 %v1398
      %v2112 = vunpack.c.l.b16 %v1399
      %v2113 = vunpack.c.h.b16 %v1399
      %v2114 = vunpack.c.l.b16 %v1400
      %v2115 = vunpack.c.h.b16 %v1400
      %v2116 = vunpack.c.l.b16 %v1401
      %v2117 = vunpack.c.h.b16 %v1401
      %v2118 = vunpack.c.l.b16 %v1402
      %v2119 = vunpack.c.h.b16 %v1402
      %v2120 = vunpack.c.l.b16 %v1403
      %v2121 = vunpack.c.h.b16 %v1403
      %v2122 = vunpack.c.l.b16 %v1404
      %v2123 = vunpack.c.h.b16 %v1404
      %v2124 = vunpack.c.l.b16 %v1405
      %v2125 = vunpack.c.h.b16 %v1405
      %v2126 = vunpack.c.l.b16 %v1406
      %v2127 = vunpack.c.h.b16 %v1406
      %v2128 = vunpack.c.l.b16 %v1407
      %v2129 = vunpack.c.h.b16 %v1407
      %v2130 = vunpack.c.l.b16 %v1408
      %v2131 = vunpack.c.h.b16 %v1408
      %v2132 = vunpack.c.l.b16 %v1409
      %v2133 = vunpack.c.h.b16 %v1409
      %v2134 = vunpack.c.l.b16 %v1410
      %v2135 = vunpack.c.h.b16 %v1410
      %v2136 = vunpack.c.l.b16 %v1411
      %v2137 = vunpack.c.h.b16 %v1411
      %v2138 = vunpack.c.l.b16 %v1412
      %v2139 = vunpack.c.h.b16 %v1412
      %v2140 = vunpack.c.l.b16 %v1413
      %v2141 = vunpack.c.h.b16 %v1413
      %v2142 = vunpack.c.l.b16 %v1414
      %v2143 = vunpack.c.h.b16 %v1414
      %v2144 = vunpack.c.l.b16 %v1415
      %v2145 = vunpack.c.h.b16 %v1415
      %v2146 = vunpack.c.l.b16 %v1416
      %v2147 = vunpack.c.h.b16 %v1416
      %v2148 = vunpack.c.l.b16 %v1417
      %v2149 = vunpack.c.h.b16 %v1417
      %v2150 = vunpack.c.l.b16 %v1418
      %v2151 = vunpack.c.h.b16 %v1418
      %v2152 = vunpack.c.l.b16 %v1419
      %v2153 = vunpack.c.h.b16 %v1419
      %v2154 = vunpack.c.l.b16 %v1420
      %v2155 = vunpack.c.h.b16 %v1420
      %v2156 = vunpack.c.l.b16 %v1421
      %v2157 = vunpack.c.h.b16 %v1421
      %v2158 = vunpack.c.l.b16 %v1422
      %v2159 = vunpack.c.h.b16 %v1422
      %v2160 = vunpack.c.l.b16 %v1423
      %v2161 = vunpack.c.h.b16 %v1423
      %v2162 = vunpack.c.l.b16 %v1424
      %v2163 = vunpack.c.h.b16 %v1424
      %v2164 = vunpack.c.l.b16 %v1425
      %v2165 = vunpack.c.h.b16 %v1425
      %v2166 = vunpack.c.l.b16 %v1426
      %v2167 = vunpack.c.h.b16 %v1426
      %v2168 = vunpack.c.l.b16 %v1427
      %v2169 = vunpack.c.h.b16 %v1427
      %v2170 = vunpack.c.l.b16 %v1428
      %v2171 = vunpack.c.h.b16 %v1428
      %v2172 = vunpack.c.l.b16 %v1429
      %v2173 = vunpack.c.h.b16 %v1429
      %v2174 = vunpack.c.l.b16 %v1430
      %v2175 = vunpack.c.h.b16 %v1430
      %v2176 = vunpack.c.l.b16 %v1431
      %v2177 = vunpack.c.h.b16 %v1431
      %v2178 = vunpack.c.l.b16 %v1432
      %v2179 = vunpack.c.h.b16 %v1432
      %v2180 = vunpack.c.l.b16 %v1433
      %v2181 = vunpack.c.h.b16 %v1433
      %v2182 = vunpack.c.l.b16 %v1434
      %v2183 = vunpack.c.h.b16 %v1434
      %v2184 = vunpack.c.l.b16 %v1435
      %v2185 = vunpack.c.h.b16 %v1435
      %v2186 = vunpack.c.l.b16 %v1436
      %v2187 = vunpack.c.h.b16 %v1436
      %v2188 = vunpack.c.l.b16 %v1437
      %v2189 = vunpack.c.h.b16 %v1437
      %v2190 = vunpack.c.l.b16 %v1438
      %v2191 = vunpack.c.h.b16 %v1438
      %v2192 = vunpack.c.l.b16 %v1439
      %v2193 = vunpack.c.h.b16 %v1439
      %v2194 = vunpack.c.l.b16 %v1440
      %v2195 = vunpack.c.h.b16 %v1440
      %v2196 = vunpack.c.l.b16 %v1441
      %v2197 = vunpack.c.h.b16 %v1441
      %v2198 = vunpack.c.l.b16 %v1442
      %v2199 = vunpack.c.h.b16 %v1442
      %v2200 = vunpack.c.l.b16 %v1443
      %v2201 = vunpack.c.h.b16 %v1443
      %v2202 = vunpack.c.l.b16 %v1444
      %v2203 = vunpack.c.h.b16 %v1444
      %v2204 = vunpack.c.l.b16 %v1445
      %v2205 = vunpack.c.h.b16 %v1445
      %v2206 = vunpack.c.l.b16 %v1446
      %v2207 = vunpack.c.h.b16 %v1446
      %v2208 = vunpack.c.l.b16 %v1447
      %v2209 = vunpack.c.h.b16 %v1447
      %v2210 = vunpack.c.l.b16 %v1448
      %v2211 = vunpack.c.h.b16 %v1448
      %v2212 = vunpack.c.l.b16 %v1449
      %v2213 = vunpack.c.h.b16 %v1449
      %v2214 = vunpack.c.l.b16 %v1450
      %v2215 = vunpack.c.h.b16 %v1450
      %v2216 = vunpack.c.l.b16 %v1451
      %v2217 = vunpack.c.h.b16 %v1451
      %v2218 = vunpack.c.l.b16 %v1452
      %v2219 = vunpack.c.h.b16 %v1452
      %v2220 = vunpack.c.l.b16 %v1453
      %v2221 = vunpack.c.h.b16 %v1453
      %v2222 = vunpack.c.l.b16 %v1454
      %v2223 = vunpack.c.h.b16 %v1454
      %v2224 = vunpack.c.l.b16 %v1455
      %v2225 = vunpack.c.h.b16 %v1455
      %v2226 = vunpack.c.l.b16 %v1456
      %v2227 = vunpack.c.h.b16 %v1456
      %v2228 = vunpack.c.l.b16 %v1457
      %v2229 = vunpack.c.h.b16 %v1457
      %v2230 = vunpack.c.l.b16 %v1458
      %v2231 = vunpack.c.h.b16 %v1458
      %v2232 = vunpack.c.l.b16 %v1459
      %v2233 = vunpack.c.h.b16 %v1459
      %v2234 = vunpack.c.l.b16 %v1460
      %v2235 = vunpack.c.h.b16 %v1460
      %v2236 = vunpack.c.l.b16 %v1461
      %v2237 = vunpack.c.h.b16 %v1461
      %v2238 = vunpack.c.l.b16 %v1462
      %v2239 = vunpack.c.h.b16 %v1462
      %v2240 = vunpack.c.l.b16 %v1463
      %v2241 = vunpack.c.h.b16 %v1463
      %v2242 = vpack.c.b16 %v1734, %v1730
      %v2243 = vpack.c.b16 %v1735, %v1731
      %v2244 = vpack.c.b16 %v1736, %v1732
      %v2245 = vpack.c.b16 %v1737, %v1733
      %v2246 = vpack.c.b16 %v1742, %v1738
      %v2247 = vpack.c.b16 %v1743, %v1739
      %v2248 = vpack.c.b16 %v1744, %v1740
      %v2249 = vpack.c.b16 %v1745, %v1741
      %v2250 = vpack.c.b16 %v1750, %v1746
      %v2251 = vpack.c.b16 %v1751, %v1747
      %v2252 = vpack.c.b16 %v1752, %v1748
      %v2253 = vpack.c.b16 %v1753, %v1749
      %v2254 = vpack.c.b16 %v1758, %v1754
      %v2255 = vpack.c.b16 %v1759, %v1755
      %v2256 = vpack.c.b16 %v1760, %v1756
      %v2257 = vpack.c.b16 %v1761, %v1757
      %v2258 = vpack.c.b16 %v1766, %v1762
      %v2259 = vpack.c.b16 %v1767, %v1763
      %v2260 = vpack.c.b16 %v1768, %v1764
      %v2261 = vpack.c.b16 %v1769, %v1765
      %v2262 = vpack.c.b16 %v1774, %v1770
      %v2263 = vpack.c.b16 %v1775, %v1771
      %v2264 = vpack.c.b16 %v1776, %v1772
      %v2265 = vpack.c.b16 %v1777, %v1773
      %v2266 = vpack.c.b16 %v1782, %v1778
      %v2267 = vpack.c.b16 %v1783, %v1779
      %v2268 = vpack.c.b16 %v1784, %v1780
      %v2269 = vpack.c.b16 %v1785, %v1781
      %v2270 = vpack.c.b16 %v1790, %v1786
      %v2271 = vpack.c.b16 %v1791, %v1787
      %v2272 = vpack.c.b16 %v1792, %v1788
      %v2273 = vpack.c.b16 %v1793, %v1789
      %v2274 = vpack.c.b16 %v1798, %v1794
      %v2275 = vpack.c.b16 %v1799, %v1795
      %v2276 = vpack.c.b16 %v1800, %v1796
      %v2277 = vpack.c.b16 %v1801, %v1797
      %v2278 = vpack.c.b16 %v1806, %v1802
      %v2279 = vpack.c.b16 %v1807, %v1803
      %v2280 = vpack.c.b16 %v1808, %v1804
      %v2281 = vpack.c.b16 %v1809, %v1805
      %v2282 = vpack.c.b16 %v1814, %v1810
      %v2283 = vpack.c.b16 %v1815, %v1811
      %v2284 = vpack.c.b16 %v1816, %v1812
      %v2285 = vpack.c.b16 %v1817, %v1813
      %v2286 = vpack.c.b16 %v1822, %v1818
      %v2287 = vpack.c.b16 %v1823, %v1819
      %v2288 = vpack.c.b16 %v1824, %v1820
      %v2289 = vpack.c.b16 %v1825, %v1821
      %v2290 = vpack.c.b16 %v1830, %v1826
      %v2291 = vpack.c.b16 %v1831, %v1827
      %v2292 = vpack.c.b16 %v1832, %v1828
      %v2293 = vpack.c.b16 %v1833, %v1829
      %v2294 = vpack.c.b16 %v1838, %v1834
      %v2295 = vpack.c.b16 %v1839, %v1835
      %v2296 = vpack.c.b16 %v1840, %v1836
      %v2297 = vpack.c.b16 %v1841, %v1837
      %v2298 = vpack.c.b16 %v1846, %v1842
      %v2299 = vpack.c.b16 %v1847, %v1843
      %v2300 = vpack.c.b16 %v1848, %v1844
      %v2301 = vpack.c.b16 %v1849, %v1845
      %v2302 = vpack.c.b16 %v1854, %v1850
      %v2303 = vpack.c.b16 %v1855, %v1851
      %v2304 = vpack.c.b16 %v1856, %v1852
      %v2305 = vpack.c.b16 %v1857, %v1853
      %v2306 = vpack.c.b16 %v1862, %v1858
      %v2307 = vpack.c.b16 %v1863, %v1859
      %v2308 = vpack.c.b16 %v1864, %v1860
      %v2309 = vpack.c.b16 %v1865, %v1861
      %v2310 = vpack.c.b16 %v1870, %v1866
      %v2311 = vpack.c.b16 %v1871, %v1867
      %v2312 = vpack.c.b16 %v1872, %v1868
      %v2313 = vpack.c.b16 %v1873, %v1869
      %v2314 = vpack.c.b16 %v1878, %v1874
      %v2315 = vpack.c.b16 %v1879, %v1875
      %v2316 = vpack.c.b16 %v1880, %v1876
      %v2317 = vpack.c.b16 %v1881, %v1877
      %v2318 = vpack.c.b16 %v1886, %v1882
      %v2319 = vpack.c.b16 %v1887, %v1883
      %v2320 = vpack.c.b16 %v1888, %v1884
      %v2321 = vpack.c.b16 %v1889, %v1885
      %v2322 = vpack.c.b16 %v1894, %v1890
      %v2323 = vpack.c.b16 %v1895, %v1891
      %v2324 = vpack.c.b16 %v1896, %v1892
      %v2325 = vpack.c.b16 %v1897, %v1893
      %v2326 = vpack.c.b16 %v1902, %v1898
      %v2327 = vpack.c.b16 %v1903, %v1899
      %v2328 = vpack.c.b16 %v1904, %v1900
      %v2329 = vpack.c.b16 %v1905, %v1901
      %v2330 = vpack.c.b16 %v1910, %v1906
      %v2331 = vpack.c.b16 %v1911, %v1907
      %v2332 = vpack.c.b16 %v1912, %v1908
      %v2333 = vpack.c.b16 %v1913, %v1909
      %v2334 = vpack.c.b16 %v1918, %v1914
      %v2335 = vpack.c.b16 %v1919, %v1915
      %v2336 = vpack.c.b16 %v1920, %v1916
      %v2337 = vpack.c.b16 %v1921, %v1917
      %v2338 = vpack.c.b16 %v1926, %v1922
      %v2339 = vpack.c.b16 %v1927, %v1923
      %v2340 = vpack.c.b16 %v1928, %v1924
      %v2341 = vpack.c.b16 %v1929, %v1925
      %v2342 = vpack.c.b16 %v1934, %v1930
      %v2343 = vpack.c.b16 %v1935, %v1931
      %v2344 = vpack.c.b16 %v1936, %v1932
      %v2345 = vpack.c.b16 %v1937, %v1933
      %v2346 = vpack.c.b16 %v1942, %v1938
      %v2347 = vpack.c.b16 %v1943, %v1939
      %v2348 = vpack.c.b16 %v1944, %v1940
      %v2349 = vpack.c.b16 %v1945, %v1941
      %v2350 = vpack.c.b16 %v1950, %v1946
      %v2351 = vpack.c.b16 %v1951, %v1947
      %v2352 = vpack.c.b16 %v1952, %v1948
      %v2353 = vpack.c.b16 %v1953, %v1949
      %v2354 = vpack.c.b16 %v1958, %v1954
      %v2355 = vpack.c.b16 %v1959, %v1955
      %v2356 = vpack.c.b16 %v1960, %v1956
      %v2357 = vpack.c.b16 %v1961, %v1957
      %v2358 = vpack.c.b16 %v1966, %v1962
      %v2359 = vpack.c.b16 %v1967, %v1963
      %v2360 = vpack.c.b16 %v1968, %v1964
      %v2361 = vpack.c.b16 %v1969, %v1965
      %v2362 = vpack.c.b16 %v1974, %v1970
      %v2363 = vpack.c.b16 %v1975, %v1971
      %v2364 = vpack.c.b16 %v1976, %v1972
      %v2365 = vpack.c.b16 %v1977, %v1973
      %v2366 = vpack.c.b16 %v1982, %v1978
      %v2367 = vpack.c.b16 %v1983, %v1979
      %v2368 = vpack.c.b16 %v1984, %v1980
      %v2369 = vpack.c.b16 %v1985, %v1981
      %v2370 = vpack.c.b16 %v1990, %v1986
      %v2371 = vpack.c.b16 %v1991, %v1987
      %v2372 = vpack.c.b16 %v1992, %v1988
      %v2373 = vpack.c.b16 %v1993, %v1989
      %v2374 = vpack.c.b16 %v1998, %v1994
      %v2375 = vpack.c.b16 %v1999, %v1995
      %v2376 = vpack.c.b16 %v2000, %v1996
      %v2377 = vpack.c.b16 %v2001, %v1997
      %v2378 = vpack.c.b16 %v2006, %v2002
      %v2379 = vpack.c.b16 %v2007, %v2003
      %v2380 = vpack.c.b16 %v2008, %v2004
      %v2381 = vpack.c.b16 %v2009, %v2005
      %v2382 = vpack.c.b16 %v2014, %v2010
      %v2383 = vpack.c.b16 %v2015, %v2011
      %v2384 = vpack.c.b16 %v2016, %v2012
      %v2385 = vpack.c.b16 %v2017, %v2013
      %v2386 = vpack.c.b16 %v2022, %v2018
      %v2387 = vpack.c.b16 %v2023, %v2019
      %v2388 = vpack.c.b16 %v2024, %v2020
      %v2389 = vpack.c.b16 %v2025, %v2021
      %v2390 = vpack.c.b16 %v2030, %v2026
      %v2391 = vpack.c.b16 %v2031, %v2027
      %v2392 = vpack.c.b16 %v2032, %v2028
      %v2393 = vpack.c.b16 %v2033, %v2029
      %v2394 = vpack.c.b16 %v2038, %v2034
      %v2395 = vpack.c.b16 %v2039, %v2035
      %v2396 = vpack.c.b16 %v2040, %v2036
      %v2397 = vpack.c.b16 %v2041, %v2037
      %v2398 = vpack.c.b16 %v2046, %v2042
      %v2399 = vpack.c.b16 %v2047, %v2043
      %v2400 = vpack.c.b16 %v2048, %v2044
      %v2401 = vpack.c.b16 %v2049, %v2045
      %v2402 = vpack.c.b16 %v2054, %v2050
      %v2403 = vpack.c.b16 %v2055, %v2051
      %v2404 = vpack.c.b16 %v2056, %v2052
      %v2405 = vpack.c.b16 %v2057, %v2053
      %v2406 = vpack.c.b16 %v2062, %v2058
      %v2407 = vpack.c.b16 %v2063, %v2059
      %v2408 = vpack.c.b16 %v2064, %v2060
      %v2409 = vpack.c.b16 %v2065, %v2061
      %v2410 = vpack.c.b16 %v2070, %v2066
      %v2411 = vpack.c.b16 %v2071, %v2067
      %v2412 = vpack.c.b16 %v2072, %v2068
      %v2413 = vpack.c.b16 %v2073, %v2069
      %v2414 = vpack.c.b16 %v2078, %v2074
      %v2415 = vpack.c.b16 %v2079, %v2075
      %v2416 = vpack.c.b16 %v2080, %v2076
      %v2417 = vpack.c.b16 %v2081, %v2077
      %v2418 = vpack.c.b16 %v2086, %v2082
      %v2419 = vpack.c.b16 %v2087, %v2083
      %v2420 = vpack.c.b16 %v2088, %v2084
      %v2421 = vpack.c.b16 %v2089, %v2085
      %v2422 = vpack.c.b16 %v2094, %v2090
      %v2423 = vpack.c.b16 %v2095, %v2091
      %v2424 = vpack.c.b16 %v2096, %v2092
      %v2425 = vpack.c.b16 %v2097, %v2093
      %v2426 = vpack.c.b16 %v2102, %v2098
      %v2427 = vpack.c.b16 %v2103, %v2099
      %v2428 = vpack.c.b16 %v2104, %v2100
      %v2429 = vpack.c.b16 %v2105, %v2101
      %v2430 = vpack.c.b16 %v2110, %v2106
      %v2431 = vpack.c.b16 %v2111, %v2107
      %v2432 = vpack.c.b16 %v2112, %v2108
      %v2433 = vpack.c.b16 %v2113, %v2109
      %v2434 = vpack.c.b16 %v2118, %v2114
      %v2435 = vpack.c.b16 %v2119, %v2115
      %v2436 = vpack.c.b16 %v2120, %v2116
      %v2437 = vpack.c.b16 %v2121, %v2117
      %v2438 = vpack.c.b16 %v2126, %v2122
      %v2439 = vpack.c.b16 %v2127, %v2123
      %v2440 = vpack.c.b16 %v2128, %v2124
      %v2441 = vpack.c.b16 %v2129, %v2125
      %v2442 = vpack.c.b16 %v2134, %v2130
      %v2443 = vpack.c.b16 %v2135, %v2131
      %v2444 = vpack.c.b16 %v2136, %v2132
      %v2445 = vpack.c.b16 %v2137, %v2133
      %v2446 = vpack.c.b16 %v2142, %v2138
      %v2447 = vpack.c.b16 %v2143, %v2139
      %v2448 = vpack.c.b16 %v2144, %v2140
      %v2449 = vpack.c.b16 %v2145, %v2141
      %v2450 = vpack.c.b16 %v2150, %v2146
      %v2451 = vpack.c.b16 %v2151, %v2147
      %v2452 = vpack.c.b16 %v2152, %v2148
      %v2453 = vpack.c.b16 %v2153, %v2149
      %v2454 = vpack.c.b16 %v2158, %v2154
      %v2455 = vpack.c.b16 %v2159, %v2155
      %v2456 = vpack.c.b16 %v2160, %v2156
      %v2457 = vpack.c.b16 %v2161, %v2157
      %v2458 = vpack.c.b16 %v2166, %v2162
      %v2459 = vpack.c.b16 %v2167, %v2163
      %v2460 = vpack.c.b16 %v2168, %v2164
      %v2461 = vpack.c.b16 %v2169, %v2165
      %v2462 = vpack.c.b16 %v2174, %v2170
      %v2463 = vpack.c.b16 %v2175, %v2171
      %v2464 = vpack.c.b16 %v2176, %v2172
      %v2465 = vpack.c.b16 %v2177, %v2173
      %v2466 = vpack.c.b16 %v2182, %v2178
      %v2467 = vpack.c.b16 %v2183, %v2179
      %v2468 = vpack.c.b16 %v2184, %v2180
      %v2469 = vpack.c.b16 %v2185, %v2181
      %v2470 = vpack.c.b16 %v2190, %v2186
      %v2471 = vpack.c.b16 %v2191, %v2187
      %v2472 = vpack.c.b16 %v2192, %v2188
      %v2473 = vpack.c.b16 %v2193, %v2189
      %v2474 = vpack.c.b16 %v2198, %v2194
      %v2475 = vpack.c.b16 %v2199, %v2195
      %v2476 = vpack.c.b16 %v2200, %v2196
      %v2477 = vpack.c.b16 %v2201, %v2197
      %v2478 = vpack.c.b16 %v2206, %v2202
      %v2479 = vpack.c.b16 %v2207, %v2203
      %v2480 = vpack.c.b16 %v2208, %v2204
      %v2481 = vpack.c.b16 %v2209, %v2205
      %v2482 = vpack.c.b16 %v2214, %v2210
      %v2483 = vpack.c.b16 %v2215, %v2211
      %v2484 = vpack.c.b16 %v2216, %v2212
      %v2485 = vpack.c.b16 %v2217, %v2213
      %v2486 = vpack.c.b16 %v2222, %v2218
      %v2487 = vpack.c.b16 %v2223, %v2219
      %v2488 = vpack.c.b16 %v2224, %v2220
      %v2489 = vpack.c.b16 %v2225, %v2221
      %v2490 = vpack.c.b16 %v2230, %v2226
      %v2491 = vpack.c.b16 %v2231, %v2227
      %v2492 = vpack.c.b16 %v2232, %v2228
      %v2493 = vpack.c.b16 %v2233, %v2229
      %v2494 = vpack.c.b16 %v2238, %v2234
      %v2495 = vpack.c.b16 %v2239, %v2235
      %v2496 = vpack.c.b16 %v2240, %v2236
      %v2497 = vpack.c.b16 %v2241, %v2237
      %2754 = vmatpush.bf16.msra.mxu0 %v2270
      %2755 = vmatpush.bf16.msra.mxu0 %v2266
      %2756 = vmatpush.bf16.msra.mxu0 %v2262
      %2757 = vmatpush.bf16.msra.mxu0 %v2258
      %2758 = vmatpush.bf16.msra.mxu0 %v2254
      %2759 = vmatpush.bf16.msra.mxu0 %v2250
      %2760 = vmatpush.bf16.msra.mxu0 %v2246
      %2761 = vmatpush.bf16.msra.mxu0 %v2242
      %2762 = vmatmul.bf16.gmra.mxu0 %v1200
      %v2763 = vpop.f32.mrf.mxu0
      %v2764 = vadd.f32 %v1466, %v2763
      %v2765 = vpop.f32.mrf.mxu0
      %v2766 = vadd.f32 %v1466, %v2765
      %2767 = vdwg.mxu0
      %2768 = vmatpush.bf16.msra.mxu0 %v2302
      %2769 = vmatpush.bf16.msra.mxu0 %v2298
      %2770 = vmatpush.bf16.msra.mxu0 %v2294
      %2771 = vmatpush.bf16.msra.mxu0 %v2290
      %2772 = vmatpush.bf16.msra.mxu0 %v2286
      %2773 = vmatpush.bf16.msra.mxu0 %v2282
      %2774 = vmatpush.bf16.msra.mxu0 %v2278
      %2775 = vmatpush.bf16.msra.mxu0 %v2274
      %2776 = vmatmul.bf16.gmra.mxu0 %v1201
      %v2777 = vpop.f32.mrf.mxu0
      %v2778 = vadd.f32 %v2764, %v2777
      %v2779 = vpop.f32.mrf.mxu0
      %v2780 = vadd.f32 %v2766, %v2779
      %2781 = vdwg.mxu0
      %2782 = vmatpush.bf16.msra.mxu0 %v2334
      %2783 = vmatpush.bf16.msra.mxu0 %v2330
      %2784 = vmatpush.bf16.msra.mxu0 %v2326
      %2785 = vmatpush.bf16.msra.mxu0 %v2322
      %2786 = vmatpush.bf16.msra.mxu0 %v2318
      %2787 = vmatpush.bf16.msra.mxu0 %v2314
      %2788 = vmatpush.bf16.msra.mxu0 %v2310
      %2789 = vmatpush.bf16.msra.mxu0 %v2306
      %2790 = vmatmul.bf16.gmra.mxu0 %v1202
      %v2791 = vpop.f32.mrf.mxu0
      %v2792 = vadd.f32 %v2778, %v2791
      %v2793 = vpop.f32.mrf.mxu0
      %v2794 = vadd.f32 %v2780, %v2793
      %2795 = vdwg.mxu0
      %2796 = vmatpush.bf16.msra.mxu0 %v2366
      %2797 = vmatpush.bf16.msra.mxu0 %v2362
      %2798 = vmatpush.bf16.msra.mxu0 %v2358
      %2799 = vmatpush.bf16.msra.mxu0 %v2354
      %2800 = vmatpush.bf16.msra.mxu0 %v2350
      %2801 = vmatpush.bf16.msra.mxu0 %v2346
      %2802 = vmatpush.bf16.msra.mxu0 %v2342
      %2803 = vmatpush.bf16.msra.mxu0 %v2338
      %2804 = vmatmul.bf16.gmra.mxu0 %v1203
      %v2805 = vpop.f32.mrf.mxu0
      %v2806 = vadd.f32 %v2792, %v2805
      %v2807 = vpop.f32.mrf.mxu0
      %v2808 = vadd.f32 %v2794, %v2807
      %2809 = vdwg.mxu0
      %2810 = vmatpush.bf16.msra.mxu0 %v2398
      %2811 = vmatpush.bf16.msra.mxu0 %v2394
      %2812 = vmatpush.bf16.msra.mxu0 %v2390
      %2813 = vmatpush.bf16.msra.mxu0 %v2386
      %2814 = vmatpush.bf16.msra.mxu0 %v2382
      %2815 = vmatpush.bf16.msra.mxu0 %v2378
      %2816 = vmatpush.bf16.msra.mxu0 %v2374
      %2817 = vmatpush.bf16.msra.mxu0 %v2370
      %2818 = vmatmul.bf16.gmra.mxu0 %v1204
      %v2819 = vpop.f32.mrf.mxu0
      %v2820 = vadd.f32 %v2806, %v2819
      %v2821 = vpop.f32.mrf.mxu0
      %v2822 = vadd.f32 %v2808, %v2821
      %2823 = vdwg.mxu0
      %2824 = vmatpush.bf16.msra.mxu0 %v2430
      %2825 = vmatpush.bf16.msra.mxu0 %v2426
      %2826 = vmatpush.bf16.msra.mxu0 %v2422
      %2827 = vmatpush.bf16.msra.mxu0 %v2418
      %2828 = vmatpush.bf16.msra.mxu0 %v2414
      %2829 = vmatpush.bf16.msra.mxu0 %v2410
      %2830 = vmatpush.bf16.msra.mxu0 %v2406
      %2831 = vmatpush.bf16.msra.mxu0 %v2402
      %2832 = vmatmul.bf16.gmra.mxu0 %v1205
      %v2833 = vpop.f32.mrf.mxu0
      %v2834 = vadd.f32 %v2820, %v2833
      %v2835 = vpop.f32.mrf.mxu0
      %v2836 = vadd.f32 %v2822, %v2835
      %2837 = vdwg.mxu0
      %2838 = vmatpush.bf16.msra.mxu0 %v2462
      %2839 = vmatpush.bf16.msra.mxu0 %v2458
      %2840 = vmatpush.bf16.msra.mxu0 %v2454
      %2841 = vmatpush.bf16.msra.mxu0 %v2450
      %2842 = vmatpush.bf16.msra.mxu0 %v2446
      %2843 = vmatpush.bf16.msra.mxu0 %v2442
      %2844 = vmatpush.bf16.msra.mxu0 %v2438
      %2845 = vmatpush.bf16.msra.mxu0 %v2434
      %2846 = vmatmul.bf16.gmra.mxu0 %v1206
      %v2847 = vpop.f32.mrf.mxu0
      %v2848 = vadd.f32 %v2834, %v2847
      %v2849 = vpop.f32.mrf.mxu0
      %v2850 = vadd.f32 %v2836, %v2849
      %2851 = vdwg.mxu0
      %2852 = vmatpush.bf16.msra.mxu0 %v2494
      %2853 = vmatpush.bf16.msra.mxu0 %v2490
      %2854 = vmatpush.bf16.msra.mxu0 %v2486
      %2855 = vmatpush.bf16.msra.mxu0 %v2482
      %2856 = vmatpush.bf16.msra.mxu0 %v2478
      %2857 = vmatpush.bf16.msra.mxu0 %v2474
      %2858 = vmatpush.bf16.msra.mxu0 %v2470
      %2859 = vmatpush.bf16.msra.mxu0 %v2466
      %2860 = vmatmul.bf16.gmra.mxu0 %v1207
      %v2861 = vpop.f32.mrf.mxu0
      %v2862 = vadd.f32 %v2848, %v2861
      %v2863 = vpop.f32.mrf.mxu0
      %v2864 = vadd.f32 %v2850, %v2863
      %2865 = vdwg.mxu0
      %2866 = vmatpush.bf16.msra.mxu0 %v2271
      %2867 = vmatpush.bf16.msra.mxu0 %v2267
      %2868 = vmatpush.bf16.msra.mxu0 %v2263
      %2869 = vmatpush.bf16.msra.mxu0 %v2259
      %2870 = vmatpush.bf16.msra.mxu0 %v2255
      %2871 = vmatpush.bf16.msra.mxu0 %v2251
      %2872 = vmatpush.bf16.msra.mxu0 %v2247
      %2873 = vmatpush.bf16.msra.mxu0 %v2243
      %2874 = vmatmul.bf16.gmra.mxu0 %v1200
      %v2875 = vpop.f32.mrf.mxu0
      %v2876 = vadd.f32 %v1467, %v2875
      %v2877 = vpop.f32.mrf.mxu0
      %v2878 = vadd.f32 %v1467, %v2877
      %2879 = vdwg.mxu0
      %2880 = vmatpush.bf16.msra.mxu0 %v2303
      %2881 = vmatpush.bf16.msra.mxu0 %v2299
      %2882 = vmatpush.bf16.msra.mxu0 %v2295
      %2883 = vmatpush.bf16.msra.mxu0 %v2291
      %2884 = vmatpush.bf16.msra.mxu0 %v2287
      %2885 = vmatpush.bf16.msra.mxu0 %v2283
      %2886 = vmatpush.bf16.msra.mxu0 %v2279
      %2887 = vmatpush.bf16.msra.mxu0 %v2275
      %2888 = vmatmul.bf16.gmra.mxu0 %v1201
      %v2889 = vpop.f32.mrf.mxu0
      %v2890 = vadd.f32 %v2876, %v2889
      %v2891 = vpop.f32.mrf.mxu0
      %v2892 = vadd.f32 %v2878, %v2891
      %2893 = vdwg.mxu0
      %2894 = vmatpush.bf16.msra.mxu0 %v2335
      %2895 = vmatpush.bf16.msra.mxu0 %v2331
      %2896 = vmatpush.bf16.msra.mxu0 %v2327
      %2897 = vmatpush.bf16.msra.mxu0 %v2323
      %2898 = vmatpush.bf16.msra.mxu0 %v2319
      %2899 = vmatpush.bf16.msra.mxu0 %v2315
      %2900 = vmatpush.bf16.msra.mxu0 %v2311
      %2901 = vmatpush.bf16.msra.mxu0 %v2307
      %2902 = vmatmul.bf16.gmra.mxu0 %v1202
      %v2903 = vpop.f32.mrf.mxu0
      %v2904 = vadd.f32 %v2890, %v2903
      %v2905 = vpop.f32.mrf.mxu0
      %v2906 = vadd.f32 %v2892, %v2905
      %2907 = vdwg.mxu0
      %2908 = vmatpush.bf16.msra.mxu0 %v2367
      %2909 = vmatpush.bf16.msra.mxu0 %v2363
      %2910 = vmatpush.bf16.msra.mxu0 %v2359
      %2911 = vmatpush.bf16.msra.mxu0 %v2355
      %2912 = vmatpush.bf16.msra.mxu0 %v2351
      %2913 = vmatpush.bf16.msra.mxu0 %v2347
      %2914 = vmatpush.bf16.msra.mxu0 %v2343
      %2915 = vmatpush.bf16.msra.mxu0 %v2339
      %2916 = vmatmul.bf16.gmra.mxu0 %v1203
      %v2917 = vpop.f32.mrf.mxu0
      %v2918 = vadd.f32 %v2904, %v2917
      %v2919 = vpop.f32.mrf.mxu0
      %v2920 = vadd.f32 %v2906, %v2919
      %2921 = vdwg.mxu0
      %2922 = vmatpush.bf16.msra.mxu0 %v2399
      %2923 = vmatpush.bf16.msra.mxu0 %v2395
      %2924 = vmatpush.bf16.msra.mxu0 %v2391
      %2925 = vmatpush.bf16.msra.mxu0 %v2387
      %2926 = vmatpush.bf16.msra.mxu0 %v2383
      %2927 = vmatpush.bf16.msra.mxu0 %v2379
      %2928 = vmatpush.bf16.msra.mxu0 %v2375
      %2929 = vmatpush.bf16.msra.mxu0 %v2371
      %2930 = vmatmul.bf16.gmra.mxu0 %v1204
      %v2931 = vpop.f32.mrf.mxu0
      %v2932 = vadd.f32 %v2918, %v2931
      %v2933 = vpop.f32.mrf.mxu0
      %v2934 = vadd.f32 %v2920, %v2933
      %2935 = vdwg.mxu0
      %2936 = vmatpush.bf16.msra.mxu0 %v2431
      %2937 = vmatpush.bf16.msra.mxu0 %v2427
      %2938 = vmatpush.bf16.msra.mxu0 %v2423
      %2939 = vmatpush.bf16.msra.mxu0 %v2419
      %2940 = vmatpush.bf16.msra.mxu0 %v2415
      %2941 = vmatpush.bf16.msra.mxu0 %v2411
      %2942 = vmatpush.bf16.msra.mxu0 %v2407
      %2943 = vmatpush.bf16.msra.mxu0 %v2403
      %2944 = vmatmul.bf16.gmra.mxu0 %v1205
      %v2945 = vpop.f32.mrf.mxu0
      %v2946 = vadd.f32 %v2932, %v2945
      %v2947 = vpop.f32.mrf.mxu0
      %v2948 = vadd.f32 %v2934, %v2947
      %2949 = vdwg.mxu0
      %2950 = vmatpush.bf16.msra.mxu0 %v2463
      %2951 = vmatpush.bf16.msra.mxu0 %v2459
      %2952 = vmatpush.bf16.msra.mxu0 %v2455
      %2953 = vmatpush.bf16.msra.mxu0 %v2451
      %2954 = vmatpush.bf16.msra.mxu0 %v2447
      %2955 = vmatpush.bf16.msra.mxu0 %v2443
      %2956 = vmatpush.bf16.msra.mxu0 %v2439
      %2957 = vmatpush.bf16.msra.mxu0 %v2435
      %2958 = vmatmul.bf16.gmra.mxu0 %v1206
      %v2959 = vpop.f32.mrf.mxu0
      %v2960 = vadd.f32 %v2946, %v2959
      %v2961 = vpop.f32.mrf.mxu0
      %v2962 = vadd.f32 %v2948, %v2961
      %2963 = vdwg.mxu0
      %2964 = vmatpush.bf16.msra.mxu0 %v2495
      %2965 = vmatpush.bf16.msra.mxu0 %v2491
      %2966 = vmatpush.bf16.msra.mxu0 %v2487
      %2967 = vmatpush.bf16.msra.mxu0 %v2483
      %2968 = vmatpush.bf16.msra.mxu0 %v2479
      %2969 = vmatpush.bf16.msra.mxu0 %v2475
      %2970 = vmatpush.bf16.msra.mxu0 %v2471
      %2971 = vmatpush.bf16.msra.mxu0 %v2467
      %2972 = vmatmul.bf16.gmra.mxu0 %v1207
      %v2973 = vpop.f32.mrf.mxu0
      %v2974 = vadd.f32 %v2960, %v2973
      %v2975 = vpop.f32.mrf.mxu0
      %v2976 = vadd.f32 %v2962, %v2975
      %2977 = vdwg.mxu0
      %2978 = vmatpush.bf16.msra.mxu0 %v2272
      %2979 = vmatpush.bf16.msra.mxu0 %v2268
      %2980 = vmatpush.bf16.msra.mxu0 %v2264
      %2981 = vmatpush.bf16.msra.mxu0 %v2260
      %2982 = vmatpush.bf16.msra.mxu0 %v2256
      %2983 = vmatpush.bf16.msra.mxu0 %v2252
      %2984 = vmatpush.bf16.msra.mxu0 %v2248
      %2985 = vmatpush.bf16.msra.mxu0 %v2244
      %2986 = vmatmul.bf16.gmra.mxu0 %v1200
      %v2987 = vpop.f32.mrf.mxu0
      %v2988 = vadd.f32 %v1468, %v2987
      %v2989 = vpop.f32.mrf.mxu0
      %v2990 = vadd.f32 %v1468, %v2989
      %2991 = vdwg.mxu0
      %2992 = vmatpush.bf16.msra.mxu0 %v2304
      %2993 = vmatpush.bf16.msra.mxu0 %v2300
      %2994 = vmatpush.bf16.msra.mxu0 %v2296
      %2995 = vmatpush.bf16.msra.mxu0 %v2292
      %2996 = vmatpush.bf16.msra.mxu0 %v2288
      %2997 = vmatpush.bf16.msra.mxu0 %v2284
      %2998 = vmatpush.bf16.msra.mxu0 %v2280
      %2999 = vmatpush.bf16.msra.mxu0 %v2276
      %3000 = vmatmul.bf16.gmra.mxu0 %v1201
      %v3001 = vpop.f32.mrf.mxu0
      %v3002 = vadd.f32 %v2988, %v3001
      %v3003 = vpop.f32.mrf.mxu0
      %v3004 = vadd.f32 %v2990, %v3003
      %3005 = vdwg.mxu0
      %3006 = vmatpush.bf16.msra.mxu0 %v2336
      %3007 = vmatpush.bf16.msra.mxu0 %v2332
      %3008 = vmatpush.bf16.msra.mxu0 %v2328
      %3009 = vmatpush.bf16.msra.mxu0 %v2324
      %3010 = vmatpush.bf16.msra.mxu0 %v2320
      %3011 = vmatpush.bf16.msra.mxu0 %v2316
      %3012 = vmatpush.bf16.msra.mxu0 %v2312
      %3013 = vmatpush.bf16.msra.mxu0 %v2308
      %3014 = vmatmul.bf16.gmra.mxu0 %v1202
      %v3015 = vpop.f32.mrf.mxu0
      %v3016 = vadd.f32 %v3002, %v3015
      %v3017 = vpop.f32.mrf.mxu0
      %v3018 = vadd.f32 %v3004, %v3017
      %3019 = vdwg.mxu0
      %3020 = vmatpush.bf16.msra.mxu0 %v2368
      %3021 = vmatpush.bf16.msra.mxu0 %v2364
      %3022 = vmatpush.bf16.msra.mxu0 %v2360
      %3023 = vmatpush.bf16.msra.mxu0 %v2356
      %3024 = vmatpush.bf16.msra.mxu0 %v2352
      %3025 = vmatpush.bf16.msra.mxu0 %v2348
      %3026 = vmatpush.bf16.msra.mxu0 %v2344
      %3027 = vmatpush.bf16.msra.mxu0 %v2340
      %3028 = vmatmul.bf16.gmra.mxu0 %v1203
      %v3029 = vpop.f32.mrf.mxu0
      %v3030 = vadd.f32 %v3016, %v3029
      %v3031 = vpop.f32.mrf.mxu0
      %v3032 = vadd.f32 %v3018, %v3031
      %3033 = vdwg.mxu0
      %3034 = vmatpush.bf16.msra.mxu0 %v2400
      %3035 = vmatpush.bf16.msra.mxu0 %v2396
      %3036 = vmatpush.bf16.msra.mxu0 %v2392
      %3037 = vmatpush.bf16.msra.mxu0 %v2388
      %3038 = vmatpush.bf16.msra.mxu0 %v2384
      %3039 = vmatpush.bf16.msra.mxu0 %v2380
      %3040 = vmatpush.bf16.msra.mxu0 %v2376
      %3041 = vmatpush.bf16.msra.mxu0 %v2372
      %3042 = vmatmul.bf16.gmra.mxu0 %v1204
      %v3043 = vpop.f32.mrf.mxu0
      %v3044 = vadd.f32 %v3030, %v3043
      %v3045 = vpop.f32.mrf.mxu0
      %v3046 = vadd.f32 %v3032, %v3045
      %3047 = vdwg.mxu0
      %3048 = vmatpush.bf16.msra.mxu0 %v2432
      %3049 = vmatpush.bf16.msra.mxu0 %v2428
      %3050 = vmatpush.bf16.msra.mxu0 %v2424
      %3051 = vmatpush.bf16.msra.mxu0 %v2420
      %3052 = vmatpush.bf16.msra.mxu0 %v2416
      %3053 = vmatpush.bf16.msra.mxu0 %v2412
      %3054 = vmatpush.bf16.msra.mxu0 %v2408
      %3055 = vmatpush.bf16.msra.mxu0 %v2404
      %3056 = vmatmul.bf16.gmra.mxu0 %v1205
      %v3057 = vpop.f32.mrf.mxu0
      %v3058 = vadd.f32 %v3044, %v3057
      %v3059 = vpop.f32.mrf.mxu0
      %v3060 = vadd.f32 %v3046, %v3059
      %3061 = vdwg.mxu0
      %3062 = vmatpush.bf16.msra.mxu0 %v2464
      %3063 = vmatpush.bf16.msra.mxu0 %v2460
      %3064 = vmatpush.bf16.msra.mxu0 %v2456
      %3065 = vmatpush.bf16.msra.mxu0 %v2452
      %3066 = vmatpush.bf16.msra.mxu0 %v2448
      %3067 = vmatpush.bf16.msra.mxu0 %v2444
      %3068 = vmatpush.bf16.msra.mxu0 %v2440
      %3069 = vmatpush.bf16.msra.mxu0 %v2436
      %3070 = vmatmul.bf16.gmra.mxu0 %v1206
      %v3071 = vpop.f32.mrf.mxu0
      %v3072 = vadd.f32 %v3058, %v3071
      %v3073 = vpop.f32.mrf.mxu0
      %v3074 = vadd.f32 %v3060, %v3073
      %3075 = vdwg.mxu0
      %3076 = vmatpush.bf16.msra.mxu0 %v2496
      %3077 = vmatpush.bf16.msra.mxu0 %v2492
      %3078 = vmatpush.bf16.msra.mxu0 %v2488
      %3079 = vmatpush.bf16.msra.mxu0 %v2484
      %3080 = vmatpush.bf16.msra.mxu0 %v2480
      %3081 = vmatpush.bf16.msra.mxu0 %v2476
      %3082 = vmatpush.bf16.msra.mxu0 %v2472
      %3083 = vmatpush.bf16.msra.mxu0 %v2468
      %3084 = vmatmul.bf16.gmra.mxu0 %v1207
      %v3085 = vpop.f32.mrf.mxu0
      %v3086 = vadd.f32 %v3072, %v3085
      %v3087 = vpop.f32.mrf.mxu0
      %v3088 = vadd.f32 %v3074, %v3087
      %3089 = vdwg.mxu0
      %3090 = vmatpush.bf16.msra.mxu0 %v2273
      %3091 = vmatpush.bf16.msra.mxu0 %v2269
      %3092 = vmatpush.bf16.msra.mxu0 %v2265
      %3093 = vmatpush.bf16.msra.mxu0 %v2261
      %3094 = vmatpush.bf16.msra.mxu0 %v2257
      %3095 = vmatpush.bf16.msra.mxu0 %v2253
      %3096 = vmatpush.bf16.msra.mxu0 %v2249
      %3097 = vmatpush.bf16.msra.mxu0 %v2245
      %3098 = vmatmul.bf16.gmra.mxu0 %v1200
      %v3099 = vpop.f32.mrf.mxu0
      %v3100 = vadd.f32 %v1469, %v3099
      %v3101 = vpop.f32.mrf.mxu0
      %v3102 = vadd.f32 %v1469, %v3101
      %3103 = vdwg.mxu0
      %3104 = vmatpush.bf16.msra.mxu0 %v2305
      %3105 = vmatpush.bf16.msra.mxu0 %v2301
      %3106 = vmatpush.bf16.msra.mxu0 %v2297
      %3107 = vmatpush.bf16.msra.mxu0 %v2293
      %3108 = vmatpush.bf16.msra.mxu0 %v2289
      %3109 = vmatpush.bf16.msra.mxu0 %v2285
      %3110 = vmatpush.bf16.msra.mxu0 %v2281
      %3111 = vmatpush.bf16.msra.mxu0 %v2277
      %3112 = vmatmul.bf16.gmra.mxu0 %v1201
      %v3113 = vpop.f32.mrf.mxu0
      %v3114 = vadd.f32 %v3100, %v3113
      %v3115 = vpop.f32.mrf.mxu0
      %v3116 = vadd.f32 %v3102, %v3115
      %3117 = vdwg.mxu0
      %3118 = vmatpush.bf16.msra.mxu0 %v2337
      %3119 = vmatpush.bf16.msra.mxu0 %v2333
      %3120 = vmatpush.bf16.msra.mxu0 %v2329
      %3121 = vmatpush.bf16.msra.mxu0 %v2325
      %3122 = vmatpush.bf16.msra.mxu0 %v2321
      %3123 = vmatpush.bf16.msra.mxu0 %v2317
      %3124 = vmatpush.bf16.msra.mxu0 %v2313
      %3125 = vmatpush.bf16.msra.mxu0 %v2309
      %3126 = vmatmul.bf16.gmra.mxu0 %v1202
      %v3127 = vpop.f32.mrf.mxu0
      %v3128 = vadd.f32 %v3114, %v3127
      %v3129 = vpop.f32.mrf.mxu0
      %v3130 = vadd.f32 %v3116, %v3129
      %3131 = vdwg.mxu0
      %3132 = vmatpush.bf16.msra.mxu0 %v2369
      %3133 = vmatpush.bf16.msra.mxu0 %v2365
      %3134 = vmatpush.bf16.msra.mxu0 %v2361
      %3135 = vmatpush.bf16.msra.mxu0 %v2357
      %3136 = vmatpush.bf16.msra.mxu0 %v2353
      %3137 = vmatpush.bf16.msra.mxu0 %v2349
      %3138 = vmatpush.bf16.msra.mxu0 %v2345
      %3139 = vmatpush.bf16.msra.mxu0 %v2341
      %3140 = vmatmul.bf16.gmra.mxu0 %v1203
      %v3141 = vpop.f32.mrf.mxu0
      %v3142 = vadd.f32 %v3128, %v3141
      %v3143 = vpop.f32.mrf.mxu0
      %v3144 = vadd.f32 %v3130, %v3143
      %3145 = vdwg.mxu0
      %3146 = vmatpush.bf16.msra.mxu0 %v2401
      %3147 = vmatpush.bf16.msra.mxu0 %v2397
      %3148 = vmatpush.bf16.msra.mxu0 %v2393
      %3149 = vmatpush.bf16.msra.mxu0 %v2389
      %3150 = vmatpush.bf16.msra.mxu0 %v2385
      %3151 = vmatpush.bf16.msra.mxu0 %v2381
      %3152 = vmatpush.bf16.msra.mxu0 %v2377
      %3153 = vmatpush.bf16.msra.mxu0 %v2373
      %3154 = vmatmul.bf16.gmra.mxu0 %v1204
      %v3155 = vpop.f32.mrf.mxu0
      %v3156 = vadd.f32 %v3142, %v3155
      %v3157 = vpop.f32.mrf.mxu0
      %v3158 = vadd.f32 %v3144, %v3157
      %3159 = vdwg.mxu0
      %3160 = vmatpush.bf16.msra.mxu0 %v2433
      %3161 = vmatpush.bf16.msra.mxu0 %v2429
      %3162 = vmatpush.bf16.msra.mxu0 %v2425
      %3163 = vmatpush.bf16.msra.mxu0 %v2421
      %3164 = vmatpush.bf16.msra.mxu0 %v2417
      %3165 = vmatpush.bf16.msra.mxu0 %v2413
      %3166 = vmatpush.bf16.msra.mxu0 %v2409
      %3167 = vmatpush.bf16.msra.mxu0 %v2405
      %3168 = vmatmul.bf16.gmra.mxu0 %v1205
      %v3169 = vpop.f32.mrf.mxu0
      %v3170 = vadd.f32 %v3156, %v3169
      %v3171 = vpop.f32.mrf.mxu0
      %v3172 = vadd.f32 %v3158, %v3171
      %3173 = vdwg.mxu0
      %3174 = vmatpush.bf16.msra.mxu0 %v2465
      %3175 = vmatpush.bf16.msra.mxu0 %v2461
      %3176 = vmatpush.bf16.msra.mxu0 %v2457
      %3177 = vmatpush.bf16.msra.mxu0 %v2453
      %3178 = vmatpush.bf16.msra.mxu0 %v2449
      %3179 = vmatpush.bf16.msra.mxu0 %v2445
      %3180 = vmatpush.bf16.msra.mxu0 %v2441
      %3181 = vmatpush.bf16.msra.mxu0 %v2437
      %3182 = vmatmul.bf16.gmra.mxu0 %v1206
      %v3183 = vpop.f32.mrf.mxu0
      %v3184 = vadd.f32 %v3170, %v3183
      %v3185 = vpop.f32.mrf.mxu0
      %v3186 = vadd.f32 %v3172, %v3185
      %3187 = vdwg.mxu0
      %3188 = vmatpush.bf16.msra.mxu0 %v2497
      %3189 = vmatpush.bf16.msra.mxu0 %v2493
      %3190 = vmatpush.bf16.msra.mxu0 %v2489
      %3191 = vmatpush.bf16.msra.mxu0 %v2485
      %3192 = vmatpush.bf16.msra.mxu0 %v2481
      %3193 = vmatpush.bf16.msra.mxu0 %v2477
      %3194 = vmatpush.bf16.msra.mxu0 %v2473
      %3195 = vmatpush.bf16.msra.mxu0 %v2469
      %3196 = vmatmul.bf16.gmra.mxu0 %v1207
      %v3197 = vpop.f32.mrf.mxu0
      %v3198 = vadd.f32 %v3184, %v3197
      %v3199 = vpop.f32.mrf.mxu0
      %v3200 = vadd.f32 %v3186, %v3199
      %3201 = vdwg.mxu0
      %v3202 = vmax.f32 %v2862, 0.0
      %v3203 = vmax.f32 %v2974, 0.0
      %v3204 = vmax.f32 %v3086, 0.0
      %v3205 = vmax.f32 %v3198, 0.0
      %v3206 = vmax.f32 %v2864, 0.0
      %v3207 = vmax.f32 %v2976, 0.0
      %v3208 = vmax.f32 %v3088, 0.0
      %v3209 = vmax.f32 %v3200, 0.0
      %v3210 = vpack.c.bf16 %v3206, %v3202
      %v3211 = vpack.c.bf16 %v3207, %v3203
      %v3212 = vpack.c.bf16 %v3208, %v3204
      %v3213 = vpack.c.bf16 %v3209, %v3205
      %v3214 = vld [vmem:[%s5] sm:$0xf]
      %v3215 = vld [vmem:[%s5 + $0x4] sm:$0xf]
      %v3216 = vld [vmem:[%s5 + $0x8] sm:$0xf]
      %v3217 = vld [vmem:[%s5 + $0xc] sm:$0xf]
      %v3218 = vld [vmem:[%s5 + $0x10] sm:$0xf]
      %v3219 = vld [vmem:[%s5 + $0x14] sm:$0xf]
      %v3220 = vld [vmem:[%s5 + $0x18] sm:$0xf]
      %v3221 = vld [vmem:[%s5 + $0x1c] sm:$0xf]
      %v3222 = vld [vmem:[%s5 + $0x20] sm:$0xf]
      %v3223 = vld [vmem:[%s5 + $0x24] sm:$0xf]
      %v3224 = vld [vmem:[%s5 + $0x28] sm:$0xf]
      %v3225 = vld [vmem:[%s5 + $0x2c] sm:$0xf]
      %v3226 = vld [vmem:[%s5 + $0x30] sm:$0xf]
      %v3227 = vld [vmem:[%s5 + $0x34] sm:$0xf]
      %v3228 = vld [vmem:[%s5 + $0x38] sm:$0xf]
      %v3229 = vld [vmem:[%s5 + $0x3c] sm:$0xf]
      %v3230 = vld [vmem:[%s5 + $0x40] sm:$0xf]
      %v3231 = vld [vmem:[%s5 + $0x44] sm:$0xf]
      %v3232 = vld [vmem:[%s5 + $0x48] sm:$0xf]
      %v3233 = vld [vmem:[%s5 + $0x4c] sm:$0xf]
      %v3234 = vld [vmem:[%s5 + $0x50] sm:$0xf]
      %v3235 = vld [vmem:[%s5 + $0x54] sm:$0xf]
      %v3236 = vld [vmem:[%s5 + $0x58] sm:$0xf]
      %v3237 = vld [vmem:[%s5 + $0x5c] sm:$0xf]
      %v3238 = vld [vmem:[%s5 + $0x60] sm:$0xf]
      %v3239 = vld [vmem:[%s5 + $0x64] sm:$0xf]
      %v3240 = vld [vmem:[%s5 + $0x68] sm:$0xf]
      %v3241 = vld [vmem:[%s5 + $0x6c] sm:$0xf]
      %v3242 = vld [vmem:[%s5 + $0x70] sm:$0xf]
      %v3243 = vld [vmem:[%s5 + $0x74] sm:$0xf]
      %v3244 = vld [vmem:[%s5 + $0x78] sm:$0xf]
      %v3245 = vld [vmem:[%s5 + $0x7c] sm:$0xf]
      %v3246 = vld [vmem:[%s5 + $0x80] sm:$0xf]
      %v3247 = vld [vmem:[%s5 + $0x84] sm:$0xf]
      %v3248 = vld [vmem:[%s5 + $0x88] sm:$0xf]
      %v3249 = vld [vmem:[%s5 + $0x8c] sm:$0xf]
      %v3250 = vld [vmem:[%s5 + $0x90] sm:$0xf]
      %v3251 = vld [vmem:[%s5 + $0x94] sm:$0xf]
      %v3252 = vld [vmem:[%s5 + $0x98] sm:$0xf]
      %v3253 = vld [vmem:[%s5 + $0x9c] sm:$0xf]
      %v3254 = vld [vmem:[%s5 + $0xa0] sm:$0xf]
      %v3255 = vld [vmem:[%s5 + $0xa4] sm:$0xf]
      %v3256 = vld [vmem:[%s5 + $0xa8] sm:$0xf]
      %v3257 = vld [vmem:[%s5 + $0xac] sm:$0xf]
      %v3258 = vld [vmem:[%s5 + $0xb0] sm:$0xf]
      %v3259 = vld [vmem:[%s5 + $0xb4] sm:$0xf]
      %v3260 = vld [vmem:[%s5 + $0xb8] sm:$0xf]
      %v3261 = vld [vmem:[%s5 + $0xbc] sm:$0xf]
      %v3262 = vld [vmem:[%s5 + $0xc0] sm:$0xf]
      %v3263 = vld [vmem:[%s5 + $0xc4] sm:$0xf]
      %v3264 = vld [vmem:[%s5 + $0xc8] sm:$0xf]
      %v3265 = vld [vmem:[%s5 + $0xcc] sm:$0xf]
      %v3266 = vld [vmem:[%s5 + $0xd0] sm:$0xf]
      %v3267 = vld [vmem:[%s5 + $0xd4] sm:$0xf]
      %v3268 = vld [vmem:[%s5 + $0xd8] sm:$0xf]
      %v3269 = vld [vmem:[%s5 + $0xdc] sm:$0xf]
      %v3270 = vld [vmem:[%s5 + $0xe0] sm:$0xf]
      %v3271 = vld [vmem:[%s5 + $0xe4] sm:$0xf]
      %v3272 = vld [vmem:[%s5 + $0xe8] sm:$0xf]
      %v3273 = vld [vmem:[%s5 + $0xec] sm:$0xf]
      %v3274 = vld [vmem:[%s5 + $0xf0] sm:$0xf]
      %v3275 = vld [vmem:[%s5 + $0xf4] sm:$0xf]
      %v3276 = vld [vmem:[%s5 + $0xf8] sm:$0xf]
      %v3277 = vld [vmem:[%s5 + $0xfc] sm:$0xf]
      %v3278 = vld [vmem:[%s6] sm:$0x1]
      %v3280 = vperm.slane %v3278, 0
      %v3346 = vunpack.c.l.b16 %v3214
      %v3347 = vunpack.c.l.b16 %v3215
      %v3348 = vunpack.c.l.b16 %v3216
      %v3349 = vunpack.c.l.b16 %v3217
      %v3350 = vunpack.c.l.b16 %v3218
      %v3351 = vunpack.c.l.b16 %v3219
      %v3352 = vunpack.c.l.b16 %v3220
      %v3353 = vunpack.c.l.b16 %v3221
      %v3354 = vunpack.c.l.b16 %v3222
      %v3355 = vunpack.c.l.b16 %v3223
      %v3356 = vunpack.c.l.b16 %v3224
      %v3357 = vunpack.c.l.b16 %v3225
      %v3358 = vunpack.c.l.b16 %v3226
      %v3359 = vunpack.c.l.b16 %v3227
      %v3360 = vunpack.c.l.b16 %v3228
      %v3361 = vunpack.c.l.b16 %v3229
      %v3362 = vunpack.c.l.b16 %v3230
      %v3363 = vunpack.c.l.b16 %v3231
      %v3364 = vunpack.c.l.b16 %v3232
      %v3365 = vunpack.c.l.b16 %v3233
      %v3366 = vunpack.c.l.b16 %v3234
      %v3367 = vunpack.c.l.b16 %v3235
      %v3368 = vunpack.c.l.b16 %v3236
      %v3369 = vunpack.c.l.b16 %v3237
      %v3370 = vunpack.c.l.b16 %v3238
      %v3371 = vunpack.c.l.b16 %v3239
      %v3372 = vunpack.c.l.b16 %v3240
      %v3373 = vunpack.c.l.b16 %v3241
      %v3374 = vunpack.c.l.b16 %v3242
      %v3375 = vunpack.c.l.b16 %v3243
      %v3376 = vunpack.c.l.b16 %v3244
      %v3377 = vunpack.c.l.b16 %v3245
      %v3378 = vunpack.c.l.b16 %v3246
      %v3379 = vunpack.c.l.b16 %v3247
      %v3380 = vunpack.c.l.b16 %v3248
      %v3381 = vunpack.c.l.b16 %v3249
      %v3382 = vunpack.c.l.b16 %v3250
      %v3383 = vunpack.c.l.b16 %v3251
      %v3384 = vunpack.c.l.b16 %v3252
      %v3385 = vunpack.c.l.b16 %v3253
      %v3386 = vunpack.c.l.b16 %v3254
      %v3387 = vunpack.c.l.b16 %v3255
      %v3388 = vunpack.c.l.b16 %v3256
      %v3389 = vunpack.c.l.b16 %v3257
      %v3390 = vunpack.c.l.b16 %v3258
      %v3391 = vunpack.c.l.b16 %v3259
      %v3392 = vunpack.c.l.b16 %v3260
      %v3393 = vunpack.c.l.b16 %v3261
      %v3394 = vunpack.c.l.b16 %v3262
      %v3395 = vunpack.c.l.b16 %v3263
      %v3396 = vunpack.c.l.b16 %v3264
      %v3397 = vunpack.c.l.b16 %v3265
      %v3398 = vunpack.c.l.b16 %v3266
      %v3399 = vunpack.c.l.b16 %v3267
      %v3400 = vunpack.c.l.b16 %v3268
      %v3401 = vunpack.c.l.b16 %v3269
      %v3402 = vunpack.c.l.b16 %v3270
      %v3403 = vunpack.c.l.b16 %v3271
      %v3404 = vunpack.c.l.b16 %v3272
      %v3405 = vunpack.c.l.b16 %v3273
      %v3406 = vunpack.c.l.b16 %v3274
      %v3407 = vunpack.c.l.b16 %v3275
      %v3408 = vunpack.c.l.b16 %v3276
      %v3409 = vunpack.c.l.b16 %v3277
      %v3410 = vpack.c.b16 %v3347, %v3346
      %v3411 = vpack.c.b16 %v3349, %v3348
      %v3412 = vpack.c.b16 %v3351, %v3350
      %v3413 = vpack.c.b16 %v3353, %v3352
      %v3414 = vpack.c.b16 %v3355, %v3354
      %v3415 = vpack.c.b16 %v3357, %v3356
      %v3416 = vpack.c.b16 %v3359, %v3358
      %v3417 = vpack.c.b16 %v3361, %v3360
      %v3418 = vpack.c.b16 %v3363, %v3362
      %v3419 = vpack.c.b16 %v3365, %v3364
      %v3420 = vpack.c.b16 %v3367, %v3366
      %v3421 = vpack.c.b16 %v3369, %v3368
      %v3422 = vpack.c.b16 %v3371, %v3370
      %v3423 = vpack.c.b16 %v3373, %v3372
      %v3424 = vpack.c.b16 %v3375, %v3374
      %v3425 = vpack.c.b16 %v3377, %v3376
      %v3426 = vpack.c.b16 %v3379, %v3378
      %v3427 = vpack.c.b16 %v3381, %v3380
      %v3428 = vpack.c.b16 %v3383, %v3382
      %v3429 = vpack.c.b16 %v3385, %v3384
      %v3430 = vpack.c.b16 %v3387, %v3386
      %v3431 = vpack.c.b16 %v3389, %v3388
      %v3432 = vpack.c.b16 %v3391, %v3390
      %v3433 = vpack.c.b16 %v3393, %v3392
      %v3434 = vpack.c.b16 %v3395, %v3394
      %v3435 = vpack.c.b16 %v3397, %v3396
      %v3436 = vpack.c.b16 %v3399, %v3398
      %v3437 = vpack.c.b16 %v3401, %v3400
      %v3438 = vpack.c.b16 %v3403, %v3402
      %v3439 = vpack.c.b16 %v3405, %v3404
      %v3440 = vpack.c.b16 %v3407, %v3406
      %v3441 = vpack.c.b16 %v3409, %v3408
      %3474 = vmatpush.bf16.msra.mxu0 %v3417
      %3475 = vmatpush.bf16.msra.mxu0 %v3416
      %3476 = vmatpush.bf16.msra.mxu0 %v3415
      %3477 = vmatpush.bf16.msra.mxu0 %v3414
      %3478 = vmatpush.bf16.msra.mxu0 %v3413
      %3479 = vmatpush.bf16.msra.mxu0 %v3412
      %3480 = vmatpush.bf16.msra.mxu0 %v3411
      %3481 = vmatpush.bf16.msra.mxu0 %v3410
      %3482 = vmatmul.bf16.gmra.mxu0 %v3210
      %v3483 = vpop.f32.mrf.mxu0
      %v3484 = vadd.f32 %v3280, %v3483
      %v3485 = vpop.f32.mrf.mxu0
      %v3486 = vadd.f32 %v3280, %v3485
      %3487 = vdwg.mxu0
      %3488 = vmatpush.bf16.msra.mxu0 %v3425
      %3489 = vmatpush.bf16.msra.mxu0 %v3424
      %3490 = vmatpush.bf16.msra.mxu0 %v3423
      %3491 = vmatpush.bf16.msra.mxu0 %v3422
      %3492 = vmatpush.bf16.msra.mxu0 %v3421
      %3493 = vmatpush.bf16.msra.mxu0 %v3420
      %3494 = vmatpush.bf16.msra.mxu0 %v3419
      %3495 = vmatpush.bf16.msra.mxu0 %v3418
      %3496 = vmatmul.bf16.gmra.mxu0 %v3211
      %v3497 = vpop.f32.mrf.mxu0
      %v3498 = vadd.f32 %v3484, %v3497
      %v3499 = vpop.f32.mrf.mxu0
      %v3500 = vadd.f32 %v3486, %v3499
      %3501 = vdwg.mxu0
      %3502 = vmatpush.bf16.msra.mxu0 %v3433
      %3503 = vmatpush.bf16.msra.mxu0 %v3432
      %3504 = vmatpush.bf16.msra.mxu0 %v3431
      %3505 = vmatpush.bf16.msra.mxu0 %v3430
      %3506 = vmatpush.bf16.msra.mxu0 %v3429
      %3507 = vmatpush.bf16.msra.mxu0 %v3428
      %3508 = vmatpush.bf16.msra.mxu0 %v3427
      %3509 = vmatpush.bf16.msra.mxu0 %v3426
      %3510 = vmatmul.bf16.gmra.mxu0 %v3212
      %v3511 = vpop.f32.mrf.mxu0
      %v3512 = vadd.f32 %v3498, %v3511
      %v3513 = vpop.f32.mrf.mxu0
      %v3514 = vadd.f32 %v3500, %v3513
      %3515 = vdwg.mxu0
      %3516 = vmatpush.bf16.msra.mxu0 %v3441
      %3517 = vmatpush.bf16.msra.mxu0 %v3440
      %3518 = vmatpush.bf16.msra.mxu0 %v3439
      %3519 = vmatpush.bf16.msra.mxu0 %v3438
      %3520 = vmatpush.bf16.msra.mxu0 %v3437
      %3521 = vmatpush.bf16.msra.mxu0 %v3436
      %3522 = vmatpush.bf16.msra.mxu0 %v3435
      %3523 = vmatpush.bf16.msra.mxu0 %v3434
      %3524 = vmatmul.bf16.gmra.mxu0 %v3213
      %v3525 = vpop.f32.mrf.mxu0
      %v3526 = vadd.f32 %v3512, %v3525
      %v3527 = vpop.f32.mrf.mxu0
      %v3528 = vadd.f32 %v3514, %v3527
      %3529 = vdwg.mxu0
      %3530 = vst [vmem:[#allocation8] sm:$0xff] %v3526
      %3531 = vst [vmem:[#allocation8 + $0x8] sm:$0xff] %v3528
    $region45: #{contour_sample_refine_head.1} parent=1 // pred_fallthru
      _
    // Predicated region
    $region46: #{contour_sample_refine_head.1} parent=1 // pred_check
      _
    $region47: #{contour_sample_refine_head.1} parent=1 // pred_check_branch
      %3533 = sbr.rel (0) target = $region49
    $region48: #{contour_sample_refine_head.1} parent=1 // pred_region
      %3535 = vsyncadd [#allocation5], 0
      %s3536 = sshll.u32 [#allocation8], 4
      %s3537 = int_to_ptr.vmem [resolvable:$true] %s3536
      %s3538 = sshll.u32 %s7, 4
      %s3539 = int_to_ptr.hbm [resolvable:$true] %s3538
      %3544 = dma.vmem_to_hbm [thread:$0]  %s3537, 256, %s3539, [#allocation5], 128, 128, 8
    $region49: #{contour_sample_refine_head.1} parent=1 // pred_fallthru
      _
    // Predicated region
    $region50: #{contour_sample_refine_head.1} parent=1 // pred_check
      _
    $region51: #{contour_sample_refine_head.1} parent=1 // pred_check_branch
      %3546 = sbr.rel (0) target = $region53
    $region52: #{contour_sample_refine_head.1} parent=1 // pred_region
      %3548 = dma.done [#allocation5], 256
    $region53: #{contour_sample_refine_head.1} parent=1 // pred_fallthru
      _
    %3549 = vsyncpa [#allocation4], 1
    %3550 = vsyncpa [#allocation7], 1
    %3551 = vsyncpa [#allocation5], 1

</llo_original>
